<compile_context>
chip_gen: v5e
topology: v5e:2x2
jax: 0.10.0
libtpu: 0.0.40
codegen_flags: <defaults>
</compile_context>

<pallas_src>
import jax
import jax.numpy as jnp
from jax import lax
from jax.experimental import pallas as pl
from jax.experimental.pallas import tpu as pltpu


# ----------------------------------------------------------------------------
# Fused kernel factory
# ----------------------------------------------------------------------------
def make_typilus_kernel(layer_num, timesteps, num_et):
    def kernel(*refs):
        it = iter(refs)
        counts_ref = next(it)      # [N, V]  f32 counts of non-padding subtokens per vocab id
        emb_ref = next(it)         # [V, E]  embedding table (padding row is zero)
        w_node_ref = next(it)      # [E, E]
        has_in_ref = next(it)      # [num_et, N, 1]  1.0 iff node has an in-edge of that type
        layers = []
        for li in range(layer_num):
            lr = {"w_edge": next(it),                      # [num_et, E, H]
                  "w_ih_gf": next(it)}                     # [3, H, H]  (r, z, n)
            lr["w_ih_res"] = next(it) if li > 0 else None  # [3, H, H]
            lr["w_hh"] = next(it)                          # [3, H, H]
            lr["b_ih"] = next(it)                          # [3, 1, H]
            lr["b_hh"] = next(it)                          # [3, 1, H]
            layers.append(lr)
        out_ref = next(it)         # [N, H]

        # ---- subtoken pooling (embedding sum as one MXU call) + node_layer ----
        counts = counts_ref[...]
        emb_sum = jnp.dot(counts, emb_ref[...],
                          preferred_element_type=jnp.float32)          # [N, E]
        cnt = jnp.sum(counts, axis=1, keepdims=True)                   # [N, 1]
        cnt = jnp.maximum(cnt, 1.0)        # guard all-padding rows (no NaN)
        node_emb = emb_sum * pl.reciprocal(cnt, approx=False)          # EUP slot
        state = jnp.dot(node_emb, w_node_ref[...],
                        preferred_element_type=jnp.float32)            # [N, H]

        prev_state = None
        for li in range(layer_num):
            lr = layers[li]
            x = state

            # Per-edge-type messages W_et(h_dst), masked by "has an incoming
            # edge of type et" (DGL zero-fills absent types), max over types.
            gf = None
            for et in range(num_et):
                m = jnp.dot(x, lr["w_edge"][et],
                            preferred_element_type=jnp.float32)
                m = m * has_in_ref[et]                                  # [N,1] lane bcast
                gf = m if gf is None else jnp.maximum(gf, m)

            # Input-side gates: constant across timesteps.  Residual "concat"
            # expressed as a second matmul summed in.
            gi = []
            for g in range(3):
                v = jnp.dot(gf, lr["w_ih_gf"][g],
                            preferred_element_type=jnp.float32) + lr["b_ih"][g]
                if li > 0:
                    v = v + jnp.dot(prev_state, lr["w_ih_res"][g],
                                    preferred_element_type=jnp.float32)
                gi.append(v)
            gi_r, gi_z, gi_n = gi

            w_hh_r, w_hh_z, w_hh_n = lr["w_hh"][0], lr["w_hh"][1], lr["w_hh"][2]
            b_hh_r, b_hh_z, b_hh_n = lr["b_hh"][0], lr["b_hh"][1], lr["b_hh"][2]

            def gru_step(_, h):
                gh_r = jnp.dot(h, w_hh_r, preferred_element_type=jnp.float32) + b_hh_r
                gh_z = jnp.dot(h, w_hh_z, preferred_element_type=jnp.float32) + b_hh_z
                gh_n = jnp.dot(h, w_hh_n, preferred_element_type=jnp.float32) + b_hh_n
                r = jax.nn.sigmoid(gi_r + gh_r)
                z = jax.nn.sigmoid(gi_z + gh_z)
                n = jnp.tanh(gi_n + r * gh_n)
                return (1.0 - z) * n + z * h

            # short static trip count -> fully unrolled for LLO visibility
            h = lax.fori_loop(0, timesteps[li], gru_step, x, unroll=True)

            prev_state = x
            state = h

        out_ref[...] = state

    return kernel


# ----------------------------------------------------------------------------
# Wrapper
# ----------------------------------------------------------------------------
def typilus_forward(counts, emb_table, w_node, has_in, layer_params, timesteps):
    N = counts.shape[0]
    H = w_node.shape[0]
    num_et = has_in.shape[0]
    layer_num = len(layer_params)

    args = [counts, emb_table, w_node, has_in]
    for li, p in enumerate(layer_params):
        args.append(p["w_edge"])
        args.append(p["w_ih_gf"])
        if li > 0:
            args.append(p["w_ih_res"])
        args.append(p["w_hh_g"])
        args.append(p["b_ih_g"])
        args.append(p["b_hh_g"])

    kernel = make_typilus_kernel(layer_num,
                                 tuple(int(t) for t in timesteps), num_et)
    vmem = pl.BlockSpec(memory_space=pltpu.MemorySpace.VMEM)
    return pl.pallas_call(
        kernel,
        out_shape=jax.ShapeDtypeStruct((N, H), jnp.float32),
        in_specs=[vmem] * len(args),
        out_specs=vmem,
    )(*args)


# ----------------------------------------------------------------------------
# Pure-JAX reference (correctness check against unsplit/original-form params)
# ----------------------------------------------------------------------------
def reference_forward(nodes, padding_idx, emb_table, w_node, has_in, params,
                      timesteps):
    tok_emb = emb_table[nodes]
    cnt = (nodes > padding_idx).sum(-1, keepdims=True).astype(jnp.float32)
    node_emb = tok_emb.sum(1) / cnt
    node_emb = node_emb @ w_node
    states = [node_emb]
    H = w_node.shape[0]
    for li, p in enumerate(params):
        x = states[li]
        gf = None
        for et in range(p["w_edge"].shape[0]):
            m = (x @ p["w_edge"][et]) * has_in[et]
            gf = m if gf is None else jnp.maximum(gf, m)
        gru_in = jnp.concatenate([states[li - 1], gf], -1) if li > 0 else gf
        h = x
        gi = gru_in @ p["w_ih"] + p["b_ih"]
        for _ in range(timesteps[li]):
            gh = h @ p["w_hh"] + p["b_hh"]
            r = jax.nn.sigmoid(gi[:, :H] + gh[:, :H])
            z = jax.nn.sigmoid(gi[:, H:2 * H] + gh[:, H:2 * H])
            n = jnp.tanh(gi[:, 2 * H:] + r * gh[:, 2 * H:])
            h = (1 - z) * n + z * h
        states.append(h)
    return states[-1]


# ----------------------------------------------------------------------------
# Host-side layout plumbing (weight re-layout + index plumbing, no compute hoisting)
# ----------------------------------------------------------------------------
def _stack_gates_w(w, H):          # [in, 3H] -> [3, in, H]  (r, z, n)
    return jnp.stack([w[:, :H], w[:, H:2 * H], w[:, 2 * H:]], axis=0)


def _stack_gates_b(b, H):          # [1, 3H] -> [3, 1, H]
    return jnp.stack([b[:, :H], b[:, H:2 * H], b[:, 2 * H:]], axis=0)


def _uniform(key, shape, fan_in):
    bound = 1.0 / jnp.sqrt(jnp.float32(fan_in))
    return jax.random.uniform(key, shape, jnp.float32, -bound, bound)


# ----------------------------------------------------------------------------
# Driver
# ----------------------------------------------------------------------------
if __name__ == "__main__":
    # config (embed_size == hidden_size == edge_in == edge_out, as the original
    # module implicitly requires)
    vocab_size, embed_size, padding_idx = 50, 32, 0
    edge_types = ["child", "next_token", "dfg"]
    edge_in = edge_out = hidden_size = embed_size
    layer_num = 2
    timesteps = [2, 3]
    N, S = 16, 5
    E_per_type = 24
    num_et = len(edge_types)
    H = hidden_size

    key = jax.random.PRNGKey(0)
    keys = jax.random.split(key, 32)

    # --- synthetic graph ---
    nodes = jax.random.randint(keys[0], (N, S), 0, vocab_size)
    nodes = nodes.at[:, 0].set(jnp.maximum(nodes[:, 0], 1))   # >=1 real subtoken
    edge_dst = {}
    for i, et in enumerate(edge_types):
        edge_dst[et] = jax.random.randint(keys[1 + i], (E_per_type,), 0, N)

    # has_in[et, v, 0] = 1 iff node v has an incoming edge of type et
    has_in = jnp.zeros((num_et, N, 1), jnp.float32)
    for i, et in enumerate(edge_types):
        has_in = has_in.at[i, edge_dst[et], 0].set(1.0)

    # --- deterministic parameters (original PyTorch-style form) ---
    emb_table = jax.random.normal(keys[8], (vocab_size, embed_size), jnp.float32)
    emb_table = emb_table.at[padding_idx].set(0.0)            # padding row is zero
    w_node = _uniform(keys[9], (embed_size, embed_size), embed_size)

    ggnn_params = []
    for li in range(layer_num):
        kk = jax.random.split(keys[10 + li], 8)
        in_dim = edge_out + hidden_size if li > 0 else edge_out
        ggnn_params.append(dict(
            w_edge=_uniform(kk[0], (num_et, edge_in, edge_out), edge_in),
            w_ih=_uniform(kk[1], (in_dim, 3 * hidden_size), hidden_size),
            w_hh=_uniform(kk[2], (hidden_size, 3 * hidden_size), hidden_size),
            b_ih=_uniform(kk[3], (1, 3 * hidden_size), hidden_size),
            b_hh=_uniform(kk[4], (1, 3 * hidden_size), hidden_size),
        ))

    # --- restructure weights for the fused kernel ---
    kernel_params = []
    for li, p in enumerate(ggnn_params):
        w_ih = p["w_ih"]
        if li > 0:
            # residual concat order is [residual_state, graph_feature]
            w_ih_res = _stack_gates_w(w_ih[:H], H)    # rows that hit residual
            w_ih_gf = _stack_gates_w(w_ih[H:], H)     # rows that hit graph_feature
        else:
            w_ih_res = None
            w_ih_gf = _stack_gates_w(w_ih, H)
        kernel_params.append(dict(
            w_edge=p["w_edge"],                       # [num_et, E, H] stacked layout
            w_ih_gf=w_ih_gf,
            w_ih_res=w_ih_res,
            w_hh_g=_stack_gates_w(p["w_hh"], H),
            b_ih_g=_stack_gates_b(p["b_ih"], H),
            b_hh_g=_stack_gates_b(p["b_hh"], H),
        ))

    # Embedding gather realized as a one-hot count matrix (index plumbing only);
    # the kernel turns it into a single counts @ emb_table MXU matmul.
    # With padding_idx == 0 (as the module uses), excluding padding tokens here
    # matches both the embedding sum (padding row is zero) and the token count.
    vocab_ids = jnp.arange(vocab_size)[None, None, :]                  # [1,1,V]
    valid = (nodes > padding_idx)[:, :, None]                          # [N,S,1]
    counts = jnp.sum(((nodes[:, :, None] == vocab_ids) & valid)
                     .astype(jnp.float32), axis=1)                     # [N,V]

    # --- forward pass (single fused Pallas kernel) ---
    last_state = typilus_forward(counts, emb_table, w_node, has_in,
                                 kernel_params, timesteps)
    jax.block_until_ready(last_state)

    # --- correctness check vs pure-JAX reference ---
    ref = reference_forward(nodes, padding_idx, emb_table, w_node, has_in,
                            ggnn_params, timesteps)
    assert last_state.shape == (N, hidden_size)
    assert bool(jnp.all(jnp.isfinite(last_state)))
    assert bool(jnp.allclose(last_state, ref, rtol=1e-4, atol=1e-4))

    print("KERNEL_OK")
</pallas_src>

<mosaic_0001>
module attributes {stable_mosaic.version = 11 : i64} {
  func.func @kernel(%arg0: memref<16x50xf32, #tpu.memory_space<vmem>>, %arg1: memref<50x32xf32, #tpu.memory_space<vmem>>, %arg2: memref<32x32xf32, #tpu.memory_space<vmem>>, %arg3: memref<3x16x1xf32, #tpu.memory_space<vmem>>, %arg4: memref<3x32x32xf32, #tpu.memory_space<vmem>>, %arg5: memref<3x32x32xf32, #tpu.memory_space<vmem>>, %arg6: memref<3x32x32xf32, #tpu.memory_space<vmem>>, %arg7: memref<3x1x32xf32, #tpu.memory_space<vmem>>, %arg8: memref<3x1x32xf32, #tpu.memory_space<vmem>>, %arg9: memref<3x32x32xf32, #tpu.memory_space<vmem>>, %arg10: memref<3x32x32xf32, #tpu.memory_space<vmem>>, %arg11: memref<3x32x32xf32, #tpu.memory_space<vmem>>, %arg12: memref<3x32x32xf32, #tpu.memory_space<vmem>>, %arg13: memref<3x1x32xf32, #tpu.memory_space<vmem>>, %arg14: memref<3x1x32xf32, #tpu.memory_space<vmem>>, %arg15: memref<16x32xf32, #tpu.memory_space<vmem>>) attributes {dimension_semantics = [], scalar_prefetch = 0 : i64, scratch_operands = 0 : i64, tpu.core_type = #tpu.core_type<tc>} {
    %c0 = arith.constant 0 : index
    %c0_0 = arith.constant 0 : index
    %0 = vector.load %arg0[%c0, %c0_0] : memref<16x50xf32, #tpu.memory_space<vmem>>, vector<16x50xf32>
    %c0_1 = arith.constant 0 : index
    %c0_2 = arith.constant 0 : index
    %1 = vector.load %arg1[%c0_1, %c0_2] : memref<50x32xf32, #tpu.memory_space<vmem>>, vector<50x32xf32>
    %cst = arith.constant dense<0.000000e+00> : vector<16x32xf32>
    %2 = tpu.matmul %0, %1, %cst {dimension_numbers = #tpu.dot_dimension_numbers<[1], [0], [0], [1], [0, 0, 1, 1], [], []>} : vector<16x50xf32>, vector<50x32xf32>, vector<16x32xf32> -> vector<16x32xf32>
    %cst_3 = arith.constant dense<0.000000e+00> : vector<16xf32>
    %3 = vector.multi_reduction <add>, %0, %cst_3 [1] : vector<16x50xf32> to vector<16xf32>
    %4 = vector.shape_cast %3 : vector<16xf32> to vector<16x1xf32>
    %cst_4 = arith.constant 1.000000e+00 : f32
    %5 = vector.broadcast %cst_4 : f32 to vector<16x1xf32>
    %6 = arith.maximumf %4, %5 : vector<16x1xf32>
    %7 = tpu.reciprocal %6 : vector<16x1xf32> -> vector<16x1xf32>
    %8 = vector.broadcast %7 : vector<16x1xf32> to vector<16x32xf32>
    %9 = arith.mulf %2, %8 : vector<16x32xf32>
    %c0_5 = arith.constant 0 : index
    %c0_6 = arith.constant 0 : index
    %10 = vector.load %arg2[%c0_5, %c0_6] : memref<32x32xf32, #tpu.memory_space<vmem>>, vector<32x32xf32>
    %cst_7 = arith.constant dense<0.000000e+00> : vector<16x32xf32>
    %11 = tpu.matmul %9, %10, %cst_7 {dimension_numbers = #tpu.dot_dimension_numbers<[1], [0], [0], [1], [0, 0, 1, 1], [], []>} : vector<16x32xf32>, vector<32x32xf32>, vector<16x32xf32> -> vector<16x32xf32>
    %c0_8 = arith.constant 0 : index
    %c0_9 = arith.constant 0 : index
    %c0_10 = arith.constant 0 : index
    %12 = vector.load %arg4[%c0_8, %c0_9, %c0_10] : memref<3x32x32xf32, #tpu.memory_space<vmem>>, vector<1x32x32xf32>
    %13 = vector.shape_cast %12 : vector<1x32x32xf32> to vector<32x32xf32>
    %cst_11 = arith.constant dense<0.000000e+00> : vector<16x32xf32>
    %14 = tpu.matmul %11, %13, %cst_11 {dimension_numbers = #tpu.dot_dimension_numbers<[1], [0], [0], [1], [0, 0, 1, 1], [], []>} : vector<16x32xf32>, vector<32x32xf32>, vector<16x32xf32> -> vector<16x32xf32>
    %c0_12 = arith.constant 0 : index
    %c0_13 = arith.constant 0 : index
    %c0_14 = arith.constant 0 : index
    %15 = vector.load %arg3[%c0_12, %c0_13, %c0_14] : memref<3x16x1xf32, #tpu.memory_space<vmem>>, vector<1x16x1xf32>
    %16 = vector.shape_cast %15 : vector<1x16x1xf32> to vector<16x1xf32>
    %17 = vector.broadcast %16 : vector<16x1xf32> to vector<16x32xf32>
    %18 = arith.mulf %14, %17 : vector<16x32xf32>
    %c1 = arith.constant 1 : index
    %c0_15 = arith.constant 0 : index
    %c0_16 = arith.constant 0 : index
    %19 = vector.load %arg4[%c1, %c0_15, %c0_16] : memref<3x32x32xf32, #tpu.memory_space<vmem>>, vector<1x32x32xf32>
    %20 = vector.shape_cast %19 : vector<1x32x32xf32> to vector<32x32xf32>
    %cst_17 = arith.constant dense<0.000000e+00> : vector<16x32xf32>
    %21 = tpu.matmul %11, %20, %cst_17 {dimension_numbers = #tpu.dot_dimension_numbers<[1], [0], [0], [1], [0, 0, 1, 1], [], []>} : vector<16x32xf32>, vector<32x32xf32>, vector<16x32xf32> -> vector<16x32xf32>
    %c1_18 = arith.constant 1 : index
    %c0_19 = arith.constant 0 : index
    %c0_20 = arith.constant 0 : index
    %22 = vector.load %arg3[%c1_18, %c0_19, %c0_20] : memref<3x16x1xf32, #tpu.memory_space<vmem>>, vector<1x16x1xf32>
    %23 = vector.shape_cast %22 : vector<1x16x1xf32> to vector<16x1xf32>
    %24 = vector.broadcast %23 : vector<16x1xf32> to vector<16x32xf32>
    %25 = arith.mulf %21, %24 : vector<16x32xf32>
    %26 = arith.maximumf %18, %25 : vector<16x32xf32>
    %c2 = arith.constant 2 : index
    %c0_21 = arith.constant 0 : index
    %c0_22 = arith.constant 0 : index
    %27 = vector.load %arg4[%c2, %c0_21, %c0_22] : memref<3x32x32xf32, #tpu.memory_space<vmem>>, vector<1x32x32xf32>
    %28 = vector.shape_cast %27 : vector<1x32x32xf32> to vector<32x32xf32>
    %cst_23 = arith.constant dense<0.000000e+00> : vector<16x32xf32>
    %29 = tpu.matmul %11, %28, %cst_23 {dimension_numbers = #tpu.dot_dimension_numbers<[1], [0], [0], [1], [0, 0, 1, 1], [], []>} : vector<16x32xf32>, vector<32x32xf32>, vector<16x32xf32> -> vector<16x32xf32>
    %c2_24 = arith.constant 2 : index
    %c0_25 = arith.constant 0 : index
    %c0_26 = arith.constant 0 : index
    %30 = vector.load %arg3[%c2_24, %c0_25, %c0_26] : memref<3x16x1xf32, #tpu.memory_space<vmem>>, vector<1x16x1xf32>
    %31 = vector.shape_cast %30 : vector<1x16x1xf32> to vector<16x1xf32>
    %32 = vector.broadcast %31 : vector<16x1xf32> to vector<16x32xf32>
    %33 = arith.mulf %29, %32 : vector<16x32xf32>
    %34 = arith.maximumf %26, %33 : vector<16x32xf32>
    %c0_27 = arith.constant 0 : index
    %c0_28 = arith.constant 0 : index
    %c0_29 = arith.constant 0 : index
    %35 = vector.load %arg5[%c0_27, %c0_28, %c0_29] : memref<3x32x32xf32, #tpu.memory_space<vmem>>, vector<1x32x32xf32>
    %36 = vector.shape_cast %35 : vector<1x32x32xf32> to vector<32x32xf32>
    %cst_30 = arith.constant dense<0.000000e+00> : vector<16x32xf32>
    %37 = tpu.matmul %34, %36, %cst_30 {dimension_numbers = #tpu.dot_dimension_numbers<[1], [0], [0], [1], [0, 0, 1, 1], [], []>} : vector<16x32xf32>, vector<32x32xf32>, vector<16x32xf32> -> vector<16x32xf32>
    %c0_31 = arith.constant 0 : index
    %c0_32 = arith.constant 0 : index
    %c0_33 = arith.constant 0 : index
    %38 = vector.load %arg7[%c0_31, %c0_32, %c0_33] : memref<3x1x32xf32, #tpu.memory_space<vmem>>, vector<1x1x32xf32>
    %39 = vector.shape_cast %38 : vector<1x1x32xf32> to vector<1x32xf32>
    %40 = vector.broadcast %39 : vector<1x32xf32> to vector<16x32xf32>
    %41 = arith.addf %37, %40 : vector<16x32xf32>
    %c1_34 = arith.constant 1 : index
    %c0_35 = arith.constant 0 : index
    %c0_36 = arith.constant 0 : index
    %42 = vector.load %arg5[%c1_34, %c0_35, %c0_36] : memref<3x32x32xf32, #tpu.memory_space<vmem>>, vector<1x32x32xf32>
    %43 = vector.shape_cast %42 : vector<1x32x32xf32> to vector<32x32xf32>
    %cst_37 = arith.constant dense<0.000000e+00> : vector<16x32xf32>
    %44 = tpu.matmul %34, %43, %cst_37 {dimension_numbers = #tpu.dot_dimension_numbers<[1], [0], [0], [1], [0, 0, 1, 1], [], []>} : vector<16x32xf32>, vector<32x32xf32>, vector<16x32xf32> -> vector<16x32xf32>
    %c1_38 = arith.constant 1 : index
    %c0_39 = arith.constant 0 : index
    %c0_40 = arith.constant 0 : index
    %45 = vector.load %arg7[%c1_38, %c0_39, %c0_40] : memref<3x1x32xf32, #tpu.memory_space<vmem>>, vector<1x1x32xf32>
    %46 = vector.shape_cast %45 : vector<1x1x32xf32> to vector<1x32xf32>
    %47 = vector.broadcast %46 : vector<1x32xf32> to vector<16x32xf32>
    %48 = arith.addf %44, %47 : vector<16x32xf32>
    %c2_41 = arith.constant 2 : index
    %c0_42 = arith.constant 0 : index
    %c0_43 = arith.constant 0 : index
    %49 = vector.load %arg5[%c2_41, %c0_42, %c0_43] : memref<3x32x32xf32, #tpu.memory_space<vmem>>, vector<1x32x32xf32>
    %50 = vector.shape_cast %49 : vector<1x32x32xf32> to vector<32x32xf32>
    %cst_44 = arith.constant dense<0.000000e+00> : vector<16x32xf32>
    %51 = tpu.matmul %34, %50, %cst_44 {dimension_numbers = #tpu.dot_dimension_numbers<[1], [0], [0], [1], [0, 0, 1, 1], [], []>} : vector<16x32xf32>, vector<32x32xf32>, vector<16x32xf32> -> vector<16x32xf32>
    %c2_45 = arith.constant 2 : index
    %c0_46 = arith.constant 0 : index
    %c0_47 = arith.constant 0 : index
    %52 = vector.load %arg7[%c2_45, %c0_46, %c0_47] : memref<3x1x32xf32, #tpu.memory_space<vmem>>, vector<1x1x32xf32>
    %53 = vector.shape_cast %52 : vector<1x1x32xf32> to vector<1x32xf32>
    %54 = vector.broadcast %53 : vector<1x32xf32> to vector<16x32xf32>
    %55 = arith.addf %51, %54 : vector<16x32xf32>
    %c0_48 = arith.constant 0 : index
    %c0_49 = arith.constant 0 : index
    %c0_50 = arith.constant 0 : index
    %56 = vector.load %arg6[%c0_48, %c0_49, %c0_50] : memref<3x32x32xf32, #tpu.memory_space<vmem>>, vector<1x32x32xf32>
    %57 = vector.shape_cast %56 : vector<1x32x32xf32> to vector<32x32xf32>
    %c1_51 = arith.constant 1 : index
    %c0_52 = arith.constant 0 : index
    %c0_53 = arith.constant 0 : index
    %58 = vector.load %arg6[%c1_51, %c0_52, %c0_53] : memref<3x32x32xf32, #tpu.memory_space<vmem>>, vector<1x32x32xf32>
    %59 = vector.shape_cast %58 : vector<1x32x32xf32> to vector<32x32xf32>
    %c2_54 = arith.constant 2 : index
    %c0_55 = arith.constant 0 : index
    %c0_56 = arith.constant 0 : index
    %60 = vector.load %arg6[%c2_54, %c0_55, %c0_56] : memref<3x32x32xf32, #tpu.memory_space<vmem>>, vector<1x32x32xf32>
    %61 = vector.shape_cast %60 : vector<1x32x32xf32> to vector<32x32xf32>
    %c0_57 = arith.constant 0 : index
    %c0_58 = arith.constant 0 : index
    %c0_59 = arith.constant 0 : index
    %62 = vector.load %arg8[%c0_57, %c0_58, %c0_59] : memref<3x1x32xf32, #tpu.memory_space<vmem>>, vector<1x1x32xf32>
    %63 = vector.shape_cast %62 : vector<1x1x32xf32> to vector<1x32xf32>
    %c1_60 = arith.constant 1 : index
    %c0_61 = arith.constant 0 : index
    %c0_62 = arith.constant 0 : index
    %64 = vector.load %arg8[%c1_60, %c0_61, %c0_62] : memref<3x1x32xf32, #tpu.memory_space<vmem>>, vector<1x1x32xf32>
    %65 = vector.shape_cast %64 : vector<1x1x32xf32> to vector<1x32xf32>
    %c2_63 = arith.constant 2 : index
    %c0_64 = arith.constant 0 : index
    %c0_65 = arith.constant 0 : index
    %66 = vector.load %arg8[%c2_63, %c0_64, %c0_65] : memref<3x1x32xf32, #tpu.memory_space<vmem>>, vector<1x1x32xf32>
    %67 = vector.shape_cast %66 : vector<1x1x32xf32> to vector<1x32xf32>
    %c0_i32 = arith.constant 0 : i32
    %cst_66 = arith.constant dense<0.000000e+00> : vector<16x32xf32>
    %68 = tpu.matmul %11, %57, %cst_66 {dimension_numbers = #tpu.dot_dimension_numbers<[1], [0], [0], [1], [0, 0, 1, 1], [], []>} : vector<16x32xf32>, vector<32x32xf32>, vector<16x32xf32> -> vector<16x32xf32>
    %69 = vector.broadcast %63 : vector<1x32xf32> to vector<16x32xf32>
    %70 = arith.addf %68, %69 : vector<16x32xf32>
    %cst_67 = arith.constant dense<0.000000e+00> : vector<16x32xf32>
    %71 = tpu.matmul %11, %59, %cst_67 {dimension_numbers = #tpu.dot_dimension_numbers<[1], [0], [0], [1], [0, 0, 1, 1], [], []>} : vector<16x32xf32>, vector<32x32xf32>, vector<16x32xf32> -> vector<16x32xf32>
    %72 = vector.broadcast %65 : vector<1x32xf32> to vector<16x32xf32>
    %73 = arith.addf %71, %72 : vector<16x32xf32>
    %cst_68 = arith.constant dense<0.000000e+00> : vector<16x32xf32>
    %74 = tpu.matmul %11, %61, %cst_68 {dimension_numbers = #tpu.dot_dimension_numbers<[1], [0], [0], [1], [0, 0, 1, 1], [], []>} : vector<16x32xf32>, vector<32x32xf32>, vector<16x32xf32> -> vector<16x32xf32>
    %75 = vector.broadcast %67 : vector<1x32xf32> to vector<16x32xf32>
    %76 = arith.addf %74, %75 : vector<16x32xf32>
    %77 = arith.addf %41, %70 : vector<16x32xf32>
    %78 = arith.negf %77 : vector<16x32xf32>
    %79 = math.exp %78 : vector<16x32xf32>
    %cst_69 = arith.constant 1.000000e+00 : f32
    %80 = vector.broadcast %cst_69 : f32 to vector<16x32xf32>
    %81 = arith.addf %80, %79 : vector<16x32xf32>
    %82 = arith.divf %80, %81 : vector<16x32xf32>
    %83 = arith.addf %48, %73 : vector<16x32xf32>
    %84 = arith.negf %83 : vector<16x32xf32>
    %85 = math.exp %84 : vector<16x32xf32>
    %cst_70 = arith.constant 1.000000e+00 : f32
    %86 = vector.broadcast %cst_70 : f32 to vector<16x32xf32>
    %87 = arith.addf %86, %85 : vector<16x32xf32>
    %88 = arith.divf %86, %87 : vector<16x32xf32>
    %89 = arith.mulf %82, %76 : vector<16x32xf32>
    %90 = arith.addf %55, %89 : vector<16x32xf32>
    %91 = math.tanh %90 : vector<16x32xf32>
    %cst_71 = arith.constant 1.000000e+00 : f32
    %92 = vector.broadcast %cst_71 : f32 to vector<16x32xf32>
    %93 = arith.subf %92, %88 : vector<16x32xf32>
    %94 = arith.mulf %93, %91 : vector<16x32xf32>
    %95 = arith.mulf %88, %11 : vector<16x32xf32>
    %96 = arith.addf %94, %95 : vector<16x32xf32>
    %c1_i32 = arith.constant 1 : i32
    %cst_72 = arith.constant dense<0.000000e+00> : vector<16x32xf32>
    %97 = tpu.matmul %96, %57, %cst_72 {dimension_numbers = #tpu.dot_dimension_numbers<[1], [0], [0], [1], [0, 0, 1, 1], [], []>} : vector<16x32xf32>, vector<32x32xf32>, vector<16x32xf32> -> vector<16x32xf32>
    %98 = vector.broadcast %63 : vector<1x32xf32> to vector<16x32xf32>
    %99 = arith.addf %97, %98 : vector<16x32xf32>
    %cst_73 = arith.constant dense<0.000000e+00> : vector<16x32xf32>
    %100 = tpu.matmul %96, %59, %cst_73 {dimension_numbers = #tpu.dot_dimension_numbers<[1], [0], [0], [1], [0, 0, 1, 1], [], []>} : vector<16x32xf32>, vector<32x32xf32>, vector<16x32xf32> -> vector<16x32xf32>
    %101 = vector.broadcast %65 : vector<1x32xf32> to vector<16x32xf32>
    %102 = arith.addf %100, %101 : vector<16x32xf32>
    %cst_74 = arith.constant dense<0.000000e+00> : vector<16x32xf32>
    %103 = tpu.matmul %96, %61, %cst_74 {dimension_numbers = #tpu.dot_dimension_numbers<[1], [0], [0], [1], [0, 0, 1, 1], [], []>} : vector<16x32xf32>, vector<32x32xf32>, vector<16x32xf32> -> vector<16x32xf32>
    %104 = vector.broadcast %67 : vector<1x32xf32> to vector<16x32xf32>
    %105 = arith.addf %103, %104 : vector<16x32xf32>
    %106 = arith.addf %41, %99 : vector<16x32xf32>
    %107 = arith.negf %106 : vector<16x32xf32>
    %108 = math.exp %107 : vector<16x32xf32>
    %cst_75 = arith.constant 1.000000e+00 : f32
    %109 = vector.broadcast %cst_75 : f32 to vector<16x32xf32>
    %110 = arith.addf %109, %108 : vector<16x32xf32>
    %111 = arith.divf %109, %110 : vector<16x32xf32>
    %112 = arith.addf %48, %102 : vector<16x32xf32>
    %113 = arith.negf %112 : vector<16x32xf32>
    %114 = math.exp %113 : vector<16x32xf32>
    %cst_76 = arith.constant 1.000000e+00 : f32
    %115 = vector.broadcast %cst_76 : f32 to vector<16x32xf32>
    %116 = arith.addf %115, %114 : vector<16x32xf32>
    %117 = arith.divf %115, %116 : vector<16x32xf32>
    %118 = arith.mulf %111, %105 : vector<16x32xf32>
    %119 = arith.addf %55, %118 : vector<16x32xf32>
    %120 = math.tanh %119 : vector<16x32xf32>
    %cst_77 = arith.constant 1.000000e+00 : f32
    %121 = vector.broadcast %cst_77 : f32 to vector<16x32xf32>
    %122 = arith.subf %121, %117 : vector<16x32xf32>
    %123 = arith.mulf %122, %120 : vector<16x32xf32>
    %124 = arith.mulf %117, %96 : vector<16x32xf32>
    %125 = arith.addf %123, %124 : vector<16x32xf32>
    %c0_78 = arith.constant 0 : index
    %c0_79 = arith.constant 0 : index
    %c0_80 = arith.constant 0 : index
    %126 = vector.load %arg9[%c0_78, %c0_79, %c0_80] : memref<3x32x32xf32, #tpu.memory_space<vmem>>, vector<1x32x32xf32>
    %127 = vector.shape_cast %126 : vector<1x32x32xf32> to vector<32x32xf32>
    %cst_81 = arith.constant dense<0.000000e+00> : vector<16x32xf32>
    %128 = tpu.matmul %125, %127, %cst_81 {dimension_numbers = #tpu.dot_dimension_numbers<[1], [0], [0], [1], [0, 0, 1, 1], [], []>} : vector<16x32xf32>, vector<32x32xf32>, vector<16x32xf32> -> vector<16x32xf32>
    %c0_82 = arith.constant 0 : index
    %c0_83 = arith.constant 0 : index
    %c0_84 = arith.constant 0 : index
    %129 = vector.load %arg3[%c0_82, %c0_83, %c0_84] : memref<3x16x1xf32, #tpu.memory_space<vmem>>, vector<1x16x1xf32>
    %130 = vector.shape_cast %129 : vector<1x16x1xf32> to vector<16x1xf32>
    %131 = vector.broadcast %130 : vector<16x1xf32> to vector<16x32xf32>
    %132 = arith.mulf %128, %131 : vector<16x32xf32>
    %c1_85 = arith.constant 1 : index
    %c0_86 = arith.constant 0 : index
    %c0_87 = arith.constant 0 : index
    %133 = vector.load %arg9[%c1_85, %c0_86, %c0_87] : memref<3x32x32xf32, #tpu.memory_space<vmem>>, vector<1x32x32xf32>
    %134 = vector.shape_cast %133 : vector<1x32x32xf32> to vector<32x32xf32>
    %cst_88 = arith.constant dense<0.000000e+00> : vector<16x32xf32>
    %135 = tpu.matmul %125, %134, %cst_88 {dimension_numbers = #tpu.dot_dimension_numbers<[1], [0], [0], [1], [0, 0, 1, 1], [], []>} : vector<16x32xf32>, vector<32x32xf32>, vector<16x32xf32> -> vector<16x32xf32>
    %c1_89 = arith.constant 1 : index
    %c0_90 = arith.constant 0 : index
    %c0_91 = arith.constant 0 : index
    %136 = vector.load %arg3[%c1_89, %c0_90, %c0_91] : memref<3x16x1xf32, #tpu.memory_space<vmem>>, vector<1x16x1xf32>
    %137 = vector.shape_cast %136 : vector<1x16x1xf32> to vector<16x1xf32>
    %138 = vector.broadcast %137 : vector<16x1xf32> to vector<16x32xf32>
    %139 = arith.mulf %135, %138 : vector<16x32xf32>
    %140 = arith.maximumf %132, %139 : vector<16x32xf32>
    %c2_92 = arith.constant 2 : index
    %c0_93 = arith.constant 0 : index
    %c0_94 = arith.constant 0 : index
    %141 = vector.load %arg9[%c2_92, %c0_93, %c0_94] : memref<3x32x32xf32, #tpu.memory_space<vmem>>, vector<1x32x32xf32>
    %142 = vector.shape_cast %141 : vector<1x32x32xf32> to vector<32x32xf32>
    %cst_95 = arith.constant dense<0.000000e+00> : vector<16x32xf32>
    %143 = tpu.matmul %125, %142, %cst_95 {dimension_numbers = #tpu.dot_dimension_numbers<[1], [0], [0], [1], [0, 0, 1, 1], [], []>} : vector<16x32xf32>, vector<32x32xf32>, vector<16x32xf32> -> vector<16x32xf32>
    %c2_96 = arith.constant 2 : index
    %c0_97 = arith.constant 0 : index
    %c0_98 = arith.constant 0 : index
    %144 = vector.load %arg3[%c2_96, %c0_97, %c0_98] : memref<3x16x1xf32, #tpu.memory_space<vmem>>, vector<1x16x1xf32>
    %145 = vector.shape_cast %144 : vector<1x16x1xf32> to vector<16x1xf32>
    %146 = vector.broadcast %145 : vector<16x1xf32> to vector<16x32xf32>
    %147 = arith.mulf %143, %146 : vector<16x32xf32>
    %148 = arith.maximumf %140, %147 : vector<16x32xf32>
    %c0_99 = arith.constant 0 : index
    %c0_100 = arith.constant 0 : index
    %c0_101 = arith.constant 0 : index
    %149 = vector.load %arg10[%c0_99, %c0_100, %c0_101] : memref<3x32x32xf32, #tpu.memory_space<vmem>>, vector<1x32x32xf32>
    %150 = vector.shape_cast %149 : vector<1x32x32xf32> to vector<32x32xf32>
    %cst_102 = arith.constant dense<0.000000e+00> : vector<16x32xf32>
    %151 = tpu.matmul %148, %150, %cst_102 {dimension_numbers = #tpu.dot_dimension_numbers<[1], [0], [0], [1], [0, 0, 1, 1], [], []>} : vector<16x32xf32>, vector<32x32xf32>, vector<16x32xf32> -> vector<16x32xf32>
    %c0_103 = arith.constant 0 : index
    %c0_104 = arith.constant 0 : index
    %c0_105 = arith.constant 0 : index
    %152 = vector.load %arg13[%c0_103, %c0_104, %c0_105] : memref<3x1x32xf32, #tpu.memory_space<vmem>>, vector<1x1x32xf32>
    %153 = vector.shape_cast %152 : vector<1x1x32xf32> to vector<1x32xf32>
    %154 = vector.broadcast %153 : vector<1x32xf32> to vector<16x32xf32>
    %155 = arith.addf %151, %154 : vector<16x32xf32>
    %c0_106 = arith.constant 0 : index
    %c0_107 = arith.constant 0 : index
    %c0_108 = arith.constant 0 : index
    %156 = vector.load %arg11[%c0_106, %c0_107, %c0_108] : memref<3x32x32xf32, #tpu.memory_space<vmem>>, vector<1x32x32xf32>
    %157 = vector.shape_cast %156 : vector<1x32x32xf32> to vector<32x32xf32>
    %cst_109 = arith.constant dense<0.000000e+00> : vector<16x32xf32>
    %158 = tpu.matmul %11, %157, %cst_109 {dimension_numbers = #tpu.dot_dimension_numbers<[1], [0], [0], [1], [0, 0, 1, 1], [], []>} : vector<16x32xf32>, vector<32x32xf32>, vector<16x32xf32> -> vector<16x32xf32>
    %159 = arith.addf %155, %158 : vector<16x32xf32>
    %c1_110 = arith.constant 1 : index
    %c0_111 = arith.constant 0 : index
    %c0_112 = arith.constant 0 : index
    %160 = vector.load %arg10[%c1_110, %c0_111, %c0_112] : memref<3x32x32xf32, #tpu.memory_space<vmem>>, vector<1x32x32xf32>
    %161 = vector.shape_cast %160 : vector<1x32x32xf32> to vector<32x32xf32>
    %cst_113 = arith.constant dense<0.000000e+00> : vector<16x32xf32>
    %162 = tpu.matmul %148, %161, %cst_113 {dimension_numbers = #tpu.dot_dimension_numbers<[1], [0], [0], [1], [0, 0, 1, 1], [], []>} : vector<16x32xf32>, vector<32x32xf32>, vector<16x32xf32> -> vector<16x32xf32>
    %c1_114 = arith.constant 1 : index
    %c0_115 = arith.constant 0 : index
    %c0_116 = arith.constant 0 : index
    %163 = vector.load %arg13[%c1_114, %c0_115, %c0_116] : memref<3x1x32xf32, #tpu.memory_space<vmem>>, vector<1x1x32xf32>
    %164 = vector.shape_cast %163 : vector<1x1x32xf32> to vector<1x32xf32>
    %165 = vector.broadcast %164 : vector<1x32xf32> to vector<16x32xf32>
    %166 = arith.addf %162, %165 : vector<16x32xf32>
    %c1_117 = arith.constant 1 : index
    %c0_118 = arith.constant 0 : index
    %c0_119 = arith.constant 0 : index
    %167 = vector.load %arg11[%c1_117, %c0_118, %c0_119] : memref<3x32x32xf32, #tpu.memory_space<vmem>>, vector<1x32x32xf32>
    %168 = vector.shape_cast %167 : vector<1x32x32xf32> to vector<32x32xf32>
    %cst_120 = arith.constant dense<0.000000e+00> : vector<16x32xf32>
    %169 = tpu.matmul %11, %168, %cst_120 {dimension_numbers = #tpu.dot_dimension_numbers<[1], [0], [0], [1], [0, 0, 1, 1], [], []>} : vector<16x32xf32>, vector<32x32xf32>, vector<16x32xf32> -> vector<16x32xf32>
    %170 = arith.addf %166, %169 : vector<16x32xf32>
    %c2_121 = arith.constant 2 : index
    %c0_122 = arith.constant 0 : index
    %c0_123 = arith.constant 0 : index
    %171 = vector.load %arg10[%c2_121, %c0_122, %c0_123] : memref<3x32x32xf32, #tpu.memory_space<vmem>>, vector<1x32x32xf32>
    %172 = vector.shape_cast %171 : vector<1x32x32xf32> to vector<32x32xf32>
    %cst_124 = arith.constant dense<0.000000e+00> : vector<16x32xf32>
    %173 = tpu.matmul %148, %172, %cst_124 {dimension_numbers = #tpu.dot_dimension_numbers<[1], [0], [0], [1], [0, 0, 1, 1], [], []>} : vector<16x32xf32>, vector<32x32xf32>, vector<16x32xf32> -> vector<16x32xf32>
    %c2_125 = arith.constant 2 : index
    %c0_126 = arith.constant 0 : index
    %c0_127 = arith.constant 0 : index
    %174 = vector.load %arg13[%c2_125, %c0_126, %c0_127] : memref<3x1x32xf32, #tpu.memory_space<vmem>>, vector<1x1x32xf32>
    %175 = vector.shape_cast %174 : vector<1x1x32xf32> to vector<1x32xf32>
    %176 = vector.broadcast %175 : vector<1x32xf32> to vector<16x32xf32>
    %177 = arith.addf %173, %176 : vector<16x32xf32>
    %c2_128 = arith.constant 2 : index
    %c0_129 = arith.constant 0 : index
    %c0_130 = arith.constant 0 : index
    %178 = vector.load %arg11[%c2_128, %c0_129, %c0_130] : memref<3x32x32xf32, #tpu.memory_space<vmem>>, vector<1x32x32xf32>
    %179 = vector.shape_cast %178 : vector<1x32x32xf32> to vector<32x32xf32>
    %cst_131 = arith.constant dense<0.000000e+00> : vector<16x32xf32>
    %180 = tpu.matmul %11, %179, %cst_131 {dimension_numbers = #tpu.dot_dimension_numbers<[1], [0], [0], [1], [0, 0, 1, 1], [], []>} : vector<16x32xf32>, vector<32x32xf32>, vector<16x32xf32> -> vector<16x32xf32>
    %181 = arith.addf %177, %180 : vector<16x32xf32>
    %c0_132 = arith.constant 0 : index
    %c0_133 = arith.constant 0 : index
    %c0_134 = arith.constant 0 : index
    %182 = vector.load %arg12[%c0_132, %c0_133, %c0_134] : memref<3x32x32xf32, #tpu.memory_space<vmem>>, vector<1x32x32xf32>
    %183 = vector.shape_cast %182 : vector<1x32x32xf32> to vector<32x32xf32>
    %c1_135 = arith.constant 1 : index
    %c0_136 = arith.constant 0 : index
    %c0_137 = arith.constant 0 : index
    %184 = vector.load %arg12[%c1_135, %c0_136, %c0_137] : memref<3x32x32xf32, #tpu.memory_space<vmem>>, vector<1x32x32xf32>
    %185 = vector.shape_cast %184 : vector<1x32x32xf32> to vector<32x32xf32>
    %c2_138 = arith.constant 2 : index
    %c0_139 = arith.constant 0 : index
    %c0_140 = arith.constant 0 : index
    %186 = vector.load %arg12[%c2_138, %c0_139, %c0_140] : memref<3x32x32xf32, #tpu.memory_space<vmem>>, vector<1x32x32xf32>
    %187 = vector.shape_cast %186 : vector<1x32x32xf32> to vector<32x32xf32>
    %c0_141 = arith.constant 0 : index
    %c0_142 = arith.constant 0 : index
    %c0_143 = arith.constant 0 : index
    %188 = vector.load %arg14[%c0_141, %c0_142, %c0_143] : memref<3x1x32xf32, #tpu.memory_space<vmem>>, vector<1x1x32xf32>
    %189 = vector.shape_cast %188 : vector<1x1x32xf32> to vector<1x32xf32>
    %c1_144 = arith.constant 1 : index
    %c0_145 = arith.constant 0 : index
    %c0_146 = arith.constant 0 : index
    %190 = vector.load %arg14[%c1_144, %c0_145, %c0_146] : memref<3x1x32xf32, #tpu.memory_space<vmem>>, vector<1x1x32xf32>
    %191 = vector.shape_cast %190 : vector<1x1x32xf32> to vector<1x32xf32>
    %c2_147 = arith.constant 2 : index
    %c0_148 = arith.constant 0 : index
    %c0_149 = arith.constant 0 : index
    %192 = vector.load %arg14[%c2_147, %c0_148, %c0_149] : memref<3x1x32xf32, #tpu.memory_space<vmem>>, vector<1x1x32xf32>
    %193 = vector.shape_cast %192 : vector<1x1x32xf32> to vector<1x32xf32>
    %c0_i32_150 = arith.constant 0 : i32
    %cst_151 = arith.constant dense<0.000000e+00> : vector<16x32xf32>
    %194 = tpu.matmul %125, %183, %cst_151 {dimension_numbers = #tpu.dot_dimension_numbers<[1], [0], [0], [1], [0, 0, 1, 1], [], []>} : vector<16x32xf32>, vector<32x32xf32>, vector<16x32xf32> -> vector<16x32xf32>
    %195 = vector.broadcast %189 : vector<1x32xf32> to vector<16x32xf32>
    %196 = arith.addf %194, %195 : vector<16x32xf32>
    %cst_152 = arith.constant dense<0.000000e+00> : vector<16x32xf32>
    %197 = tpu.matmul %125, %185, %cst_152 {dimension_numbers = #tpu.dot_dimension_numbers<[1], [0], [0], [1], [0, 0, 1, 1], [], []>} : vector<16x32xf32>, vector<32x32xf32>, vector<16x32xf32> -> vector<16x32xf32>
    %198 = vector.broadcast %191 : vector<1x32xf32> to vector<16x32xf32>
    %199 = arith.addf %197, %198 : vector<16x32xf32>
    %cst_153 = arith.constant dense<0.000000e+00> : vector<16x32xf32>
    %200 = tpu.matmul %125, %187, %cst_153 {dimension_numbers = #tpu.dot_dimension_numbers<[1], [0], [0], [1], [0, 0, 1, 1], [], []>} : vector<16x32xf32>, vector<32x32xf32>, vector<16x32xf32> -> vector<16x32xf32>
    %201 = vector.broadcast %193 : vector<1x32xf32> to vector<16x32xf32>
    %202 = arith.addf %200, %201 : vector<16x32xf32>
    %203 = arith.addf %159, %196 : vector<16x32xf32>
    %204 = arith.negf %203 : vector<16x32xf32>
    %205 = math.exp %204 : vector<16x32xf32>
    %cst_154 = arith.constant 1.000000e+00 : f32
    %206 = vector.broadcast %cst_154 : f32 to vector<16x32xf32>
    %207 = arith.addf %206, %205 : vector<16x32xf32>
    %208 = arith.divf %206, %207 : vector<16x32xf32>
    %209 = arith.addf %170, %199 : vector<16x32xf32>
    %210 = arith.negf %209 : vector<16x32xf32>
    %211 = math.exp %210 : vector<16x32xf32>
    %cst_155 = arith.constant 1.000000e+00 : f32
    %212 = vector.broadcast %cst_155 : f32 to vector<16x32xf32>
    %213 = arith.addf %212, %211 : vector<16x32xf32>
    %214 = arith.divf %212, %213 : vector<16x32xf32>
    %215 = arith.mulf %208, %202 : vector<16x32xf32>
    %216 = arith.addf %181, %215 : vector<16x32xf32>
    %217 = math.tanh %216 : vector<16x32xf32>
    %cst_156 = arith.constant 1.000000e+00 : f32
    %218 = vector.broadcast %cst_156 : f32 to vector<16x32xf32>
    %219 = arith.subf %218, %214 : vector<16x32xf32>
    %220 = arith.mulf %219, %217 : vector<16x32xf32>
    %221 = arith.mulf %214, %125 : vector<16x32xf32>
    %222 = arith.addf %220, %221 : vector<16x32xf32>
    %c1_i32_157 = arith.constant 1 : i32
    %cst_158 = arith.constant dense<0.000000e+00> : vector<16x32xf32>
    %223 = tpu.matmul %222, %183, %cst_158 {dimension_numbers = #tpu.dot_dimension_numbers<[1], [0], [0], [1], [0, 0, 1, 1], [], []>} : vector<16x32xf32>, vector<32x32xf32>, vector<16x32xf32> -> vector<16x32xf32>
    %224 = vector.broadcast %189 : vector<1x32xf32> to vector<16x32xf32>
    %225 = arith.addf %223, %224 : vector<16x32xf32>
    %cst_159 = arith.constant dense<0.000000e+00> : vector<16x32xf32>
    %226 = tpu.matmul %222, %185, %cst_159 {dimension_numbers = #tpu.dot_dimension_numbers<[1], [0], [0], [1], [0, 0, 1, 1], [], []>} : vector<16x32xf32>, vector<32x32xf32>, vector<16x32xf32> -> vector<16x32xf32>
    %227 = vector.broadcast %191 : vector<1x32xf32> to vector<16x32xf32>
    %228 = arith.addf %226, %227 : vector<16x32xf32>
    %cst_160 = arith.constant dense<0.000000e+00> : vector<16x32xf32>
    %229 = tpu.matmul %222, %187, %cst_160 {dimension_numbers = #tpu.dot_dimension_numbers<[1], [0], [0], [1], [0, 0, 1, 1], [], []>} : vector<16x32xf32>, vector<32x32xf32>, vector<16x32xf32> -> vector<16x32xf32>
    %230 = vector.broadcast %193 : vector<1x32xf32> to vector<16x32xf32>
    %231 = arith.addf %229, %230 : vector<16x32xf32>
    %232 = arith.addf %159, %225 : vector<16x32xf32>
    %233 = arith.negf %232 : vector<16x32xf32>
    %234 = math.exp %233 : vector<16x32xf32>
    %cst_161 = arith.constant 1.000000e+00 : f32
    %235 = vector.broadcast %cst_161 : f32 to vector<16x32xf32>
    %236 = arith.addf %235, %234 : vector<16x32xf32>
    %237 = arith.divf %235, %236 : vector<16x32xf32>
    %238 = arith.addf %170, %228 : vector<16x32xf32>
    %239 = arith.negf %238 : vector<16x32xf32>
    %240 = math.exp %239 : vector<16x32xf32>
    %cst_162 = arith.constant 1.000000e+00 : f32
    %241 = vector.broadcast %cst_162 : f32 to vector<16x32xf32>
    %242 = arith.addf %241, %240 : vector<16x32xf32>
    %243 = arith.divf %241, %242 : vector<16x32xf32>
    %244 = arith.mulf %237, %231 : vector<16x32xf32>
    %245 = arith.addf %181, %244 : vector<16x32xf32>
    %246 = math.tanh %245 : vector<16x32xf32>
    %cst_163 = arith.constant 1.000000e+00 : f32
    %247 = vector.broadcast %cst_163 : f32 to vector<16x32xf32>
    %248 = arith.subf %247, %243 : vector<16x32xf32>
    %249 = arith.mulf %248, %246 : vector<16x32xf32>
    %250 = arith.mulf %243, %222 : vector<16x32xf32>
    %251 = arith.addf %249, %250 : vector<16x32xf32>
    %c2_i32 = arith.constant 2 : i32
    %cst_164 = arith.constant dense<0.000000e+00> : vector<16x32xf32>
    %252 = tpu.matmul %251, %183, %cst_164 {dimension_numbers = #tpu.dot_dimension_numbers<[1], [0], [0], [1], [0, 0, 1, 1], [], []>} : vector<16x32xf32>, vector<32x32xf32>, vector<16x32xf32> -> vector<16x32xf32>
    %253 = vector.broadcast %189 : vector<1x32xf32> to vector<16x32xf32>
    %254 = arith.addf %252, %253 : vector<16x32xf32>
    %cst_165 = arith.constant dense<0.000000e+00> : vector<16x32xf32>
    %255 = tpu.matmul %251, %185, %cst_165 {dimension_numbers = #tpu.dot_dimension_numbers<[1], [0], [0], [1], [0, 0, 1, 1], [], []>} : vector<16x32xf32>, vector<32x32xf32>, vector<16x32xf32> -> vector<16x32xf32>
    %256 = vector.broadcast %191 : vector<1x32xf32> to vector<16x32xf32>
    %257 = arith.addf %255, %256 : vector<16x32xf32>
    %cst_166 = arith.constant dense<0.000000e+00> : vector<16x32xf32>
    %258 = tpu.matmul %251, %187, %cst_166 {dimension_numbers = #tpu.dot_dimension_numbers<[1], [0], [0], [1], [0, 0, 1, 1], [], []>} : vector<16x32xf32>, vector<32x32xf32>, vector<16x32xf32> -> vector<16x32xf32>
    %259 = vector.broadcast %193 : vector<1x32xf32> to vector<16x32xf32>
    %260 = arith.addf %258, %259 : vector<16x32xf32>
    %261 = arith.addf %159, %254 : vector<16x32xf32>
    %262 = arith.negf %261 : vector<16x32xf32>
    %263 = math.exp %262 : vector<16x32xf32>
    %cst_167 = arith.constant 1.000000e+00 : f32
    %264 = vector.broadcast %cst_167 : f32 to vector<16x32xf32>
    %265 = arith.addf %264, %263 : vector<16x32xf32>
    %266 = arith.divf %264, %265 : vector<16x32xf32>
    %267 = arith.addf %170, %257 : vector<16x32xf32>
    %268 = arith.negf %267 : vector<16x32xf32>
    %269 = math.exp %268 : vector<16x32xf32>
    %cst_168 = arith.constant 1.000000e+00 : f32
    %270 = vector.broadcast %cst_168 : f32 to vector<16x32xf32>
    %271 = arith.addf %270, %269 : vector<16x32xf32>
    %272 = arith.divf %270, %271 : vector<16x32xf32>
    %273 = arith.mulf %266, %260 : vector<16x32xf32>
    %274 = arith.addf %181, %273 : vector<16x32xf32>
    %275 = math.tanh %274 : vector<16x32xf32>
    %cst_169 = arith.constant 1.000000e+00 : f32
    %276 = vector.broadcast %cst_169 : f32 to vector<16x32xf32>
    %277 = arith.subf %276, %272 : vector<16x32xf32>
    %278 = arith.mulf %277, %275 : vector<16x32xf32>
    %279 = arith.mulf %272, %251 : vector<16x32xf32>
    %280 = arith.addf %278, %279 : vector<16x32xf32>
    %c0_170 = arith.constant 0 : index
    %c0_171 = arith.constant 0 : index
    %281 = vector.load %arg15[%c0_170, %c0_171] : memref<16x32xf32, #tpu.memory_space<vmem>>, vector<16x32xf32>
    tpu.vector_store %arg15[%c0_170, %c0_171], %280 {strides = array<i32>} : memref<16x32xf32, #tpu.memory_space<vmem>>, vector<16x32xf32>,
    return
  }
}

</mosaic_0001>

<llo_original>
// kernel: tpu_custom_call.1
$region0: #{tpu_custom_call.1}
  #allocation0 [shape = 'u32[]', space=smem, size = 0x4, offset = 0x4, fixed_abs, tag = 'smem constant byte address 0x4 - core index']
  #allocation1 [shape = 'u32[72,128]{1,0:T(1,128)}', space=vmem, size = 0x9000, scoped, tag = 'internal scratch']
  %s0 = inlined_call_operand.hbm [shape: f32[16,50], index: 0, kind: input, shape index: {}]
  %s1 = inlined_call_operand.vmem [shape: f32[50,32], index: 1, kind: input, shape index: {}]
  %s2 = inlined_call_operand.hbm [shape: f32[32,32], index: 2, kind: input, shape index: {}]
  %s3 = inlined_call_operand.vmem [shape: f32[3,16,1], index: 3, kind: input, shape index: {}]
  %s4 = inlined_call_operand.vmem [shape: f32[3,32,32], index: 4, kind: input, shape index: {}]
  %s5 = inlined_call_operand.hbm [shape: f32[3,32,32], index: 5, kind: input, shape index: {}]
  %s6 = inlined_call_operand.hbm [shape: f32[3,32,32], index: 6, kind: input, shape index: {}]
  %s7 = inlined_call_operand.vmem [shape: f32[3,1,32], index: 7, kind: input, shape index: {}]
  %s8 = inlined_call_operand.vmem [shape: f32[3,1,32], index: 8, kind: input, shape index: {}]
  %s9 = inlined_call_operand.hbm [shape: f32[3,32,32], index: 9, kind: input, shape index: {}]
  %s10 = inlined_call_operand.hbm [shape: f32[3,32,32], index: 10, kind: input, shape index: {}]
  %s11 = inlined_call_operand.hbm [shape: f32[3,32,32], index: 11, kind: input, shape index: {}]
  %s12 = inlined_call_operand.hbm [shape: f32[3,32,32], index: 12, kind: input, shape index: {}]
  %s13 = inlined_call_operand.vmem [shape: f32[3,1,32], index: 13, kind: input, shape index: {}]
  %s14 = inlined_call_operand.vmem [shape: f32[3,1,32], index: 14, kind: input, shape index: {}]
  %s15 = inlined_call_operand.hbm [shape: f32[16,32], index: 15, kind: output, shape index: {}]
  %s16 = sld [smem:[#allocation0]]
  $region102: #{tpu_custom_call.1} parent=0
    _
  %s18 = ssub.s32 1, %s16
  %s19 = scalar_select 0, %s18, %s16
  $region1: #{tpu_custom_call.1} parent=0
    #allocation2 [shape = 'u8[8192]{0}', space=vmem, size = 0x2000, scoped, tag = 'input window, operand 0, single buffered']
    #allocation3 [shape = 's32[1]{0}', space=sflag, size = 0x4, scoped, tag = 'scoped memory for tpu_custom_call.1']
    #allocation4 [shape = 's32[1]{0}', space=sflag, size = 0x4, scoped, tag = 'scoped memory for tpu_custom_call.1']
    #allocation5 [shape = 'u8[16384]{0}', space=vmem, size = 0x4000, scoped, tag = 'input window, operand 2, single buffered']
    #allocation6 [shape = 's32[1]{0}', space=sflag, size = 0x4, scoped, tag = 'scoped memory for tpu_custom_call.1']
    #allocation7 [shape = 'u8[49152]{0}', space=vmem, size = 0xc000, scoped, tag = 'input window, operand 5, single buffered']
    #allocation8 [shape = 'u8[49152]{0}', space=vmem, size = 0xc000, scoped, tag = 'input window, operand 6, single buffered']
    #allocation9 [shape = 's32[1]{0}', space=sflag, size = 0x4, scoped, tag = 'scoped memory for tpu_custom_call.1']
    #allocation10 [shape = 'u8[49152]{0}', space=vmem, size = 0xc000, scoped, tag = 'input window, operand 9, single buffered']
    #allocation11 [shape = 'u8[49152]{0}', space=vmem, size = 0xc000, scoped, tag = 'input window, operand 10, single buffered']
    #allocation12 [shape = 's32[1]{0}', space=sflag, size = 0x4, scoped, tag = 'scoped memory for tpu_custom_call.1']
    #allocation13 [shape = 'u8[49152]{0}', space=vmem, size = 0xc000, scoped, tag = 'input window, operand 11, single buffered']
    #allocation14 [shape = 'u8[49152]{0}', space=vmem, size = 0xc000, scoped, tag = 'input window, operand 12, single buffered']
    #allocation15 [shape = 's32[1]{0}', space=sflag, size = 0x4, scoped, tag = 'scoped memory for tpu_custom_call.1']
    #allocation16 [shape = 'u8[8192]{0}', space=vmem, size = 0x2000, scoped, tag = 'output window, operand 0, single buffered']
    %20 = vsyncpa [#allocation3], 0
    %21 = vsyncpa [#allocation6], 0
    %22 = vsyncpa [#allocation9], 0
    %23 = vsyncpa [#allocation12], 0
    %24 = vsyncpa [#allocation15], 0
    %25 = vsyncpa [#allocation4], 0
    // Predicated region
    $region2: #{tpu_custom_call.1} parent=1 // pred_check
      _
    $region3: #{tpu_custom_call.1} parent=1 // pred_check_branch
      %27 = sbr.rel (0) target = $region5
    $region4: #{tpu_custom_call.1} parent=1 // pred_region
      %29 = vsyncadd [#allocation3], 0
      %s30 = sshll.u32 %s0, 4
      %s31 = int_to_ptr.hbm [resolvable:$true] %s30
      %s32 = sshll.u32 [#allocation2], 4
      %s33 = int_to_ptr.vmem [resolvable:$true] %s32
      %38 = dma.hbm_to_vmem [thread:$0]  %s31, 256, %s33, [#allocation3], 128, 128, 8
    $region5: #{tpu_custom_call.1} parent=1 // pred_fallthru
      _
    // Predicated region
    $region6: #{tpu_custom_call.1} parent=1 // pred_check
      _
    $region7: #{tpu_custom_call.1} parent=1 // pred_check_branch
      %40 = sbr.rel (0) target = $region9
    $region8: #{tpu_custom_call.1} parent=1 // pred_region
      _
    $region9: #{tpu_custom_call.1} parent=1 // pred_fallthru
      _
    // Predicated region
    $region10: #{tpu_custom_call.1} parent=1 // pred_check
      _
    $region11: #{tpu_custom_call.1} parent=1 // pred_check_branch
      %42 = sbr.rel (0) target = $region13
    $region12: #{tpu_custom_call.1} parent=1 // pred_region
      %44 = vsyncadd [#allocation6], 0
      %s45 = sshll.u32 %s2, 4
      %s46 = int_to_ptr.hbm [resolvable:$true] %s45
      %s47 = sshll.u32 [#allocation5], 4
      %s48 = int_to_ptr.vmem [resolvable:$true] %s47
      %53 = dma.hbm_to_vmem [thread:$0]  %s46, 512, %s48, [#allocation6], 128, 128, 8
    $region13: #{tpu_custom_call.1} parent=1 // pred_fallthru
      _
    // Predicated region
    $region14: #{tpu_custom_call.1} parent=1 // pred_check
      _
    $region15: #{tpu_custom_call.1} parent=1 // pred_check_branch
      %55 = sbr.rel (0) target = $region17
    $region16: #{tpu_custom_call.1} parent=1 // pred_region
      _
    $region17: #{tpu_custom_call.1} parent=1 // pred_fallthru
      _
    // Predicated region
    $region18: #{tpu_custom_call.1} parent=1 // pred_check
      _
    $region19: #{tpu_custom_call.1} parent=1 // pred_check_branch
      %57 = sbr.rel (0) target = $region21
    $region20: #{tpu_custom_call.1} parent=1 // pred_region
      _
    $region21: #{tpu_custom_call.1} parent=1 // pred_fallthru
      _
    // Predicated region
    $region22: #{tpu_custom_call.1} parent=1 // pred_check
      _
    $region23: #{tpu_custom_call.1} parent=1 // pred_check_branch
      %59 = sbr.rel (0) target = $region25
    $region24: #{tpu_custom_call.1} parent=1 // pred_region
      %61 = vsyncadd [#allocation6], 0
      %s62 = sshll.u32 %s5, 4
      %s63 = int_to_ptr.hbm [resolvable:$true] %s62
      %s64 = sshll.u32 [#allocation7], 4
      %s65 = int_to_ptr.vmem [resolvable:$true] %s64
      %70 = dma.hbm_to_vmem [thread:$0]  %s63, 1536, %s65, [#allocation6], 128, 128, 8
    $region25: #{tpu_custom_call.1} parent=1 // pred_fallthru
      _
    // Predicated region
    $region26: #{tpu_custom_call.1} parent=1 // pred_check
      _
    $region27: #{tpu_custom_call.1} parent=1 // pred_check_branch
      %72 = sbr.rel (0) target = $region29
    $region28: #{tpu_custom_call.1} parent=1 // pred_region
      %74 = vsyncadd [#allocation9], 0
      %s75 = sshll.u32 %s6, 4
      %s76 = int_to_ptr.hbm [resolvable:$true] %s75
      %s77 = sshll.u32 [#allocation8], 4
      %s78 = int_to_ptr.vmem [resolvable:$true] %s77
      %83 = dma.hbm_to_vmem [thread:$0]  %s76, 1536, %s78, [#allocation9], 128, 128, 8
    $region29: #{tpu_custom_call.1} parent=1 // pred_fallthru
      _
    // Predicated region
    $region30: #{tpu_custom_call.1} parent=1 // pred_check
      _
    $region31: #{tpu_custom_call.1} parent=1 // pred_check_branch
      %85 = sbr.rel (0) target = $region33
    $region32: #{tpu_custom_call.1} parent=1 // pred_region
      _
    $region33: #{tpu_custom_call.1} parent=1 // pred_fallthru
      _
    // Predicated region
    $region34: #{tpu_custom_call.1} parent=1 // pred_check
      _
    $region35: #{tpu_custom_call.1} parent=1 // pred_check_branch
      %87 = sbr.rel (0) target = $region37
    $region36: #{tpu_custom_call.1} parent=1 // pred_region
      _
    $region37: #{tpu_custom_call.1} parent=1 // pred_fallthru
      _
    // Predicated region
    $region38: #{tpu_custom_call.1} parent=1 // pred_check
      _
    $region39: #{tpu_custom_call.1} parent=1 // pred_check_branch
      %89 = sbr.rel (0) target = $region41
    $region40: #{tpu_custom_call.1} parent=1 // pred_region
      %91 = vsyncadd [#allocation9], 0
      %s92 = sshll.u32 %s9, 4
      %s93 = int_to_ptr.hbm [resolvable:$true] %s92
      %s94 = sshll.u32 [#allocation10], 4
      %s95 = int_to_ptr.vmem [resolvable:$true] %s94
      %100 = dma.hbm_to_vmem [thread:$0]  %s93, 1536, %s95, [#allocation9], 128, 128, 8
    $region41: #{tpu_custom_call.1} parent=1 // pred_fallthru
      _
    // Predicated region
    $region42: #{tpu_custom_call.1} parent=1 // pred_check
      _
    $region43: #{tpu_custom_call.1} parent=1 // pred_check_branch
      %102 = sbr.rel (0) target = $region45
    $region44: #{tpu_custom_call.1} parent=1 // pred_region
      %104 = vsyncadd [#allocation12], 0
      %s105 = sshll.u32 %s10, 4
      %s106 = int_to_ptr.hbm [resolvable:$true] %s105
      %s107 = sshll.u32 [#allocation11], 4
      %s108 = int_to_ptr.vmem [resolvable:$true] %s107
      %113 = dma.hbm_to_vmem [thread:$0]  %s106, 1536, %s108, [#allocation12], 128, 128, 8
    $region45: #{tpu_custom_call.1} parent=1 // pred_fallthru
      _
    // Predicated region
    $region46: #{tpu_custom_call.1} parent=1 // pred_check
      _
    $region47: #{tpu_custom_call.1} parent=1 // pred_check_branch
      %115 = sbr.rel (0) target = $region49
    $region48: #{tpu_custom_call.1} parent=1 // pred_region
      %117 = vsyncadd [#allocation12], 0
      %s118 = sshll.u32 %s11, 4
      %s119 = int_to_ptr.hbm [resolvable:$true] %s118
      %s120 = sshll.u32 [#allocation13], 4
      %s121 = int_to_ptr.vmem [resolvable:$true] %s120
      %126 = dma.hbm_to_vmem [thread:$0]  %s119, 1536, %s121, [#allocation12], 128, 128, 8
    $region49: #{tpu_custom_call.1} parent=1 // pred_fallthru
      _
    // Predicated region
    $region50: #{tpu_custom_call.1} parent=1 // pred_check
      _
    $region51: #{tpu_custom_call.1} parent=1 // pred_check_branch
      %128 = sbr.rel (0) target = $region53
    $region52: #{tpu_custom_call.1} parent=1 // pred_region
      %130 = vsyncadd [#allocation15], 0
      %s131 = sshll.u32 %s12, 4
      %s132 = int_to_ptr.hbm [resolvable:$true] %s131
      %s133 = sshll.u32 [#allocation14], 4
      %s134 = int_to_ptr.vmem [resolvable:$true] %s133
      %139 = dma.hbm_to_vmem [thread:$0]  %s132, 1536, %s134, [#allocation15], 128, 128, 8
    $region53: #{tpu_custom_call.1} parent=1 // pred_fallthru
      _
    // Predicated region
    $region54: #{tpu_custom_call.1} parent=1 // pred_check
      _
    $region55: #{tpu_custom_call.1} parent=1 // pred_check_branch
      %141 = sbr.rel (0) target = $region57
    $region56: #{tpu_custom_call.1} parent=1 // pred_region
      _
    $region57: #{tpu_custom_call.1} parent=1 // pred_fallthru
      _
    // Predicated region
    $region58: #{tpu_custom_call.1} parent=1 // pred_check
      _
    $region59: #{tpu_custom_call.1} parent=1 // pred_check_branch
      %143 = sbr.rel (0) target = $region61
    $region60: #{tpu_custom_call.1} parent=1 // pred_region
      _
    $region61: #{tpu_custom_call.1} parent=1 // pred_fallthru
      _
    // Predicated region
    $region62: #{tpu_custom_call.1} parent=1 // pred_check
      _
    $region63: #{tpu_custom_call.1} parent=1 // pred_check_branch
      %145 = sbr.rel (0) target = $region65
    $region64: #{tpu_custom_call.1} parent=1 // pred_region
      %147 = dma.done [#allocation3], 256
    $region65: #{tpu_custom_call.1} parent=1 // pred_fallthru
      _
    // Predicated region
    $region66: #{tpu_custom_call.1} parent=1 // pred_check
      _
    $region67: #{tpu_custom_call.1} parent=1 // pred_check_branch
      %149 = sbr.rel (0) target = $region69
    $region68: #{tpu_custom_call.1} parent=1 // pred_region
      %151 = dma.done [#allocation6], 512
    $region69: #{tpu_custom_call.1} parent=1 // pred_fallthru
      _
    // Predicated region
    $region70: #{tpu_custom_call.1} parent=1 // pred_check
      _
    $region71: #{tpu_custom_call.1} parent=1 // pred_check_branch
      %153 = sbr.rel (0) target = $region73
    $region72: #{tpu_custom_call.1} parent=1 // pred_region
      %155 = dma.done [#allocation6], 1536
    $region73: #{tpu_custom_call.1} parent=1 // pred_fallthru
      _
    // Predicated region
    $region74: #{tpu_custom_call.1} parent=1 // pred_check
      _
    $region75: #{tpu_custom_call.1} parent=1 // pred_check_branch
      %157 = sbr.rel (0) target = $region77
    $region76: #{tpu_custom_call.1} parent=1 // pred_region
      %159 = dma.done [#allocation9], 1536
    $region77: #{tpu_custom_call.1} parent=1 // pred_fallthru
      _
    // Predicated region
    $region78: #{tpu_custom_call.1} parent=1 // pred_check
      _
    $region79: #{tpu_custom_call.1} parent=1 // pred_check_branch
      %161 = sbr.rel (0) target = $region81
    $region80: #{tpu_custom_call.1} parent=1 // pred_region
      %163 = dma.done [#allocation9], 1536
    $region81: #{tpu_custom_call.1} parent=1 // pred_fallthru
      _
    // Predicated region
    $region82: #{tpu_custom_call.1} parent=1 // pred_check
      _
    $region83: #{tpu_custom_call.1} parent=1 // pred_check_branch
      %165 = sbr.rel (0) target = $region85
    $region84: #{tpu_custom_call.1} parent=1 // pred_region
      %167 = dma.done [#allocation12], 1536
    $region85: #{tpu_custom_call.1} parent=1 // pred_fallthru
      _
    // Predicated region
    $region86: #{tpu_custom_call.1} parent=1 // pred_check
      _
    $region87: #{tpu_custom_call.1} parent=1 // pred_check_branch
      %169 = sbr.rel (0) target = $region89
    $region88: #{tpu_custom_call.1} parent=1 // pred_region
      %171 = dma.done [#allocation12], 1536
    $region89: #{tpu_custom_call.1} parent=1 // pred_fallthru
      _
    // Predicated region
    $region90: #{tpu_custom_call.1} parent=1 // pred_check
      _
    $region91: #{tpu_custom_call.1} parent=1 // pred_check_branch
      %173 = sbr.rel (0) target = $region93
    $region92: #{tpu_custom_call.1} parent=1 // pred_region
      %175 = dma.done [#allocation15], 1536
    $region93: #{tpu_custom_call.1} parent=1 // pred_fallthru
      _
    %v176 = vld [vmem:[#allocation2] sm:$0xff]
    %v177 = vld [vmem:[#allocation2 + $0x8] sm:$0xff]
    %v178 = vld [vmem:[%s1] sm:$0xff]
    %v179 = vld [vmem:[%s1 + $0x8] sm:$0xff]
    %v180 = vld [vmem:[%s1 + $0x10] sm:$0xff]
    %v181 = vld [vmem:[%s1 + $0x18] sm:$0xff]
    %v182 = vld [vmem:[%s1 + $0x20] sm:$0xff]
    %v183 = vld [vmem:[%s1 + $0x28] sm:$0xff]
    %v184 = vld [vmem:[%s1 + $0x30] sm:$0x3]
    %vm185 = vcmask 408576
    %v187 = vsel %vm185, %v176, 0
    %v190 = vsel %vm185, %v177, 0
    %vm192 = vcmask 1041408
    %v194 = vsel %vm192, %v184, 0
    %196 = vmatpush.msra.mxu0 0.0
    %197 = vmatpush.msra.mxu0 0.0
    %198 = vmatpush.msra.mxu0 0.0
    %199 = vmatpush.msra.mxu0 0.0
    %200 = vmatpush.msra.mxu0 0.0
    %201 = vmatpush.msra.mxu0 0.0
    %202 = vmatpush.msra.mxu0 0.0
    %203 = vmatpush.msra.mxu0 0.0
    %204 = vmatpush.msra.mxu0 0.0
    %205 = vmatpush.msra.mxu0 %v194
    %206 = vmatpush.msra.mxu0 %v183
    %207 = vmatpush.msra.mxu0 %v182
    %208 = vmatpush.msra.mxu0 %v181
    %209 = vmatpush.msra.mxu0 %v180
    %210 = vmatpush.msra.mxu0 %v179
    %211 = vmatpush.msra.mxu0 %v178
    %212 = vmatmul.f32.gmra.mxu0 %v187
    %v213 = vpop.f32.mrf.mxu0
    %v214 = vadd.f32 0.0, %v213
    %215 = vmatmul.f32.gmra.mxu0 %v190
    %v216 = vpop.f32.mrf.mxu0
    %v217 = vadd.f32 0.0, %v216
    %218 = vdwg.mxu0
    %v219 = vsel %vm185, %v176, 0.0
    %220 = vadd.xlane.f32.xlu0 %v219
    %v221 = vpop.xlane.xlu0 %220
    %v222 = vsel %vm185, %v177, 0.0
    %223 = vadd.xlane.f32.xlu0 %v222
    %v224 = vpop.xlane.xlu0 %223
    %v225 = vmax.f32 %v221, 1.0
    %v226 = vmax.f32 %v224, 1.0
    %v227 = vrcp.pop %v225
    %v228 = vmul.f32 %v225, %v227
    %v229 = vsub.f32 1.0, %v228
    %v230 = vmul.f32 %v227, %v229
    %v231 = vadd.f32 %v227, %v230
    %vm232 = vweird.f32 %v225
    %vm233 = vweird.f32 %v227
    %vm234 = vmor %vm232, %vm233
    %v235 = vsel %vm234, %v227, %v231
    %v236 = vand.u32 2147483647, %v225
    %vm237 = vcmp.eq.f32.partialorder %v236, 8.507059e+37
    %v238 = vand.u32 %v225, 2147483648
    %v239 = vor.u32 1.1754944e-38, %v238
    %v240 = vsel %vm237, %v239, %v235
    %v241 = vrcp.pop %v226
    %v242 = vmul.f32 %v226, %v241
    %v243 = vsub.f32 1.0, %v242
    %v244 = vmul.f32 %v241, %v243
    %v245 = vadd.f32 %v241, %v244
    %vm246 = vweird.f32 %v226
    %vm247 = vweird.f32 %v241
    %vm248 = vmor %vm246, %vm247
    %v249 = vsel %vm248, %v241, %v245
    %v250 = vand.u32 2147483647, %v226
    %vm251 = vcmp.eq.f32.partialorder %v250, 8.507059e+37
    %v252 = vand.u32 %v226, 2147483648
    %v253 = vor.u32 1.1754944e-38, %v252
    %v254 = vsel %vm251, %v253, %v249
    %v255 = vmul.f32 %v214, %v240
    %v256 = vmul.f32 %v217, %v254
    %v257 = vld [vmem:[#allocation5] sm:$0xff]
    %v258 = vld [vmem:[#allocation5 + $0x8] sm:$0xff]
    %v259 = vld [vmem:[#allocation5 + $0x10] sm:$0xff]
    %v260 = vld [vmem:[#allocation5 + $0x18] sm:$0xff]
    %vm261 = vcmask 261120
    %v263 = vsel %vm261, %v255, 0
    %v266 = vsel %vm261, %v256, 0
    %268 = vmatpush.msra.mxu0 0.0
    %269 = vmatpush.msra.mxu0 0.0
    %270 = vmatpush.msra.mxu0 0.0
    %271 = vmatpush.msra.mxu0 0.0
    %272 = vmatpush.msra.mxu0 0.0
    %273 = vmatpush.msra.mxu0 0.0
    %274 = vmatpush.msra.mxu0 0.0
    %275 = vmatpush.msra.mxu0 0.0
    %276 = vmatpush.msra.mxu0 0.0
    %277 = vmatpush.msra.mxu0 0.0
    %278 = vmatpush.msra.mxu0 0.0
    %279 = vmatpush.msra.mxu0 0.0
    %280 = vmatpush.msra.mxu0 %v260
    %281 = vmatpush.msra.mxu0 %v259
    %282 = vmatpush.msra.mxu0 %v258
    %283 = vmatpush.msra.mxu0 %v257
    %284 = vmatmul.f32.gmra.mxu0 %v263
    %v285 = vpop.f32.mrf.mxu0
    %v286 = vadd.f32 0.0, %v285
    %287 = vmatmul.f32.gmra.mxu0 %v266
    %v288 = vpop.f32.mrf.mxu0
    %v289 = vadd.f32 0.0, %v288
    %290 = vdwg.mxu0
    %v291 = vld [vmem:[%s4] sm:$0xff]
    %v292 = vld [vmem:[%s4 + $0x8] sm:$0xff]
    %v293 = vld [vmem:[%s4 + $0x10] sm:$0xff]
    %v294 = vld [vmem:[%s4 + $0x18] sm:$0xff]
    %v296 = vsel %vm261, %v286, 0
    %v299 = vsel %vm261, %v289, 0
    %301 = vmatpush.msra.mxu0 0.0
    %302 = vmatpush.msra.mxu0 0.0
    %303 = vmatpush.msra.mxu0 0.0
    %304 = vmatpush.msra.mxu0 0.0
    %305 = vmatpush.msra.mxu0 0.0
    %306 = vmatpush.msra.mxu0 0.0
    %307 = vmatpush.msra.mxu0 0.0
    %308 = vmatpush.msra.mxu0 0.0
    %309 = vmatpush.msra.mxu0 0.0
    %310 = vmatpush.msra.mxu0 0.0
    %311 = vmatpush.msra.mxu0 0.0
    %312 = vmatpush.msra.mxu0 0.0
    %313 = vmatpush.msra.mxu0 %v294
    %314 = vmatpush.msra.mxu0 %v293
    %315 = vmatpush.msra.mxu0 %v292
    %316 = vmatpush.msra.mxu0 %v291
    %317 = vmatmul.f32.gmra.mxu0 %v296
    %v318 = vpop.f32.mrf.mxu0
    %v319 = vadd.f32 0.0, %v318
    %320 = vmatmul.f32.gmra.mxu0 %v299
    %v321 = vpop.f32.mrf.mxu0
    %v322 = vadd.f32 0.0, %v321
    %323 = vdwg.mxu0
    %v324 = vld [vmem:[%s3] sm:$0xff]
    %v325 = vld [vmem:[%s3 + $0x8] sm:$0xff]
    %327 = vset.pattern.permute.xlu0 0
    %328 = vperm.xlu0 %327, %v324
    %v329 = vpop.permute.xlu0 %328
    %332 = vset.pattern.permute.xlu0 0
    %333 = vperm.xlu0 %332, %v325
    %v334 = vpop.permute.xlu0 %333
    %v336 = vmul.f32 %v319, %v329
    %v337 = vmul.f32 %v322, %v334
    %s338 = scalar_lea.vmem %s4, 32
    %v339 = vld [vmem:[%s338] sm:$0xff]
    %v340 = vld [vmem:[%s338 + $0x8] sm:$0xff]
    %v341 = vld [vmem:[%s338 + $0x10] sm:$0xff]
    %v342 = vld [vmem:[%s338 + $0x18] sm:$0xff]
    %343 = vmatpush.msra.mxu0 0.0
    %344 = vmatpush.msra.mxu0 0.0
    %345 = vmatpush.msra.mxu0 0.0
    %346 = vmatpush.msra.mxu0 0.0
    %347 = vmatpush.msra.mxu0 0.0
    %348 = vmatpush.msra.mxu0 0.0
    %349 = vmatpush.msra.mxu0 0.0
    %350 = vmatpush.msra.mxu0 0.0
    %351 = vmatpush.msra.mxu0 0.0
    %352 = vmatpush.msra.mxu0 0.0
    %353 = vmatpush.msra.mxu0 0.0
    %354 = vmatpush.msra.mxu0 0.0
    %355 = vmatpush.msra.mxu0 %v342
    %356 = vmatpush.msra.mxu0 %v341
    %357 = vmatpush.msra.mxu0 %v340
    %358 = vmatpush.msra.mxu0 %v339
    %359 = vmatmul.f32.gmra.mxu0 %v296
    %v360 = vpop.f32.mrf.mxu0
    %v361 = vadd.f32 0.0, %v360
    %362 = vmatmul.f32.gmra.mxu0 %v299
    %v363 = vpop.f32.mrf.mxu0
    %v364 = vadd.f32 0.0, %v363
    %365 = vdwg.mxu0
    %s366 = scalar_lea.vmem %s3, 16
    %v367 = vld [vmem:[%s366] sm:$0xff]
    %v368 = vld [vmem:[%s366 + $0x8] sm:$0xff]
    %370 = vset.pattern.permute.xlu0 0
    %371 = vperm.xlu0 %370, %v367
    %v372 = vpop.permute.xlu0 %371
    %375 = vset.pattern.permute.xlu0 0
    %376 = vperm.xlu0 %375, %v368
    %v377 = vpop.permute.xlu0 %376
    %v379 = vmul.f32 %v361, %v372
    %v380 = vmul.f32 %v364, %v377
    %v381 = vmax.f32 %v336, %v379
    %v382 = vmax.f32 %v337, %v380
    %s383 = scalar_lea.vmem %s4, 64
    %v384 = vld [vmem:[%s383] sm:$0xff]
    %v385 = vld [vmem:[%s383 + $0x8] sm:$0xff]
    %v386 = vld [vmem:[%s383 + $0x10] sm:$0xff]
    %v387 = vld [vmem:[%s383 + $0x18] sm:$0xff]
    %388 = vmatpush.msra.mxu0 0.0
    %389 = vmatpush.msra.mxu0 0.0
    %390 = vmatpush.msra.mxu0 0.0
    %391 = vmatpush.msra.mxu0 0.0
    %392 = vmatpush.msra.mxu0 0.0
    %393 = vmatpush.msra.mxu0 0.0
    %394 = vmatpush.msra.mxu0 0.0
    %395 = vmatpush.msra.mxu0 0.0
    %396 = vmatpush.msra.mxu0 0.0
    %397 = vmatpush.msra.mxu0 0.0
    %398 = vmatpush.msra.mxu0 0.0
    %399 = vmatpush.msra.mxu0 0.0
    %400 = vmatpush.msra.mxu0 %v387
    %401 = vmatpush.msra.mxu0 %v386
    %402 = vmatpush.msra.mxu0 %v385
    %403 = vmatpush.msra.mxu0 %v384
    %404 = vmatmul.f32.gmra.mxu0 %v296
    %v405 = vpop.f32.mrf.mxu0
    %v406 = vadd.f32 0.0, %v405
    %407 = vmatmul.f32.gmra.mxu0 %v299
    %v408 = vpop.f32.mrf.mxu0
    %v409 = vadd.f32 0.0, %v408
    %410 = vdwg.mxu0
    %s411 = scalar_lea.vmem %s3, 32
    %v412 = vld [vmem:[%s411] sm:$0xff]
    %v413 = vld [vmem:[%s411 + $0x8] sm:$0xff]
    %415 = vset.pattern.permute.xlu0 0
    %416 = vperm.xlu0 %415, %v412
    %v417 = vpop.permute.xlu0 %416
    %420 = vset.pattern.permute.xlu0 0
    %421 = vperm.xlu0 %420, %v413
    %v422 = vpop.permute.xlu0 %421
    %v424 = vmul.f32 %v406, %v417
    %v425 = vmul.f32 %v409, %v422
    %v426 = vmax.f32 %v381, %v424
    %v427 = vmax.f32 %v382, %v425
    %v428 = vld [vmem:[#allocation7] sm:$0xff]
    %v429 = vld [vmem:[#allocation7 + $0x8] sm:$0xff]
    %v430 = vld [vmem:[#allocation7 + $0x10] sm:$0xff]
    %v431 = vld [vmem:[#allocation7 + $0x18] sm:$0xff]
    %v432 = vld [vmem:[%s7] sm:$0x1]
    %v434 = vperm.slane %v432, 0
    %v437 = vsel %vm261, %v426, 0
    %v440 = vsel %vm261, %v427, 0
    %442 = vmatpush.msra.mxu0 0.0
    %443 = vmatpush.msra.mxu0 0.0
    %444 = vmatpush.msra.mxu0 0.0
    %445 = vmatpush.msra.mxu0 0.0
    %446 = vmatpush.msra.mxu0 0.0
    %447 = vmatpush.msra.mxu0 0.0
    %448 = vmatpush.msra.mxu0 0.0
    %449 = vmatpush.msra.mxu0 0.0
    %450 = vmatpush.msra.mxu0 0.0
    %451 = vmatpush.msra.mxu0 0.0
    %452 = vmatpush.msra.mxu0 0.0
    %453 = vmatpush.msra.mxu0 0.0
    %454 = vmatpush.msra.mxu0 %v431
    %455 = vmatpush.msra.mxu0 %v430
    %456 = vmatpush.msra.mxu0 %v429
    %457 = vmatpush.msra.mxu0 %v428
    %458 = vmatmul.f32.gmra.mxu0 %v437
    %v459 = vpop.f32.mrf.mxu0
    %v460 = vadd.f32 %v434, %v459
    %461 = vmatmul.f32.gmra.mxu0 %v440
    %v462 = vpop.f32.mrf.mxu0
    %v463 = vadd.f32 %v434, %v462
    %464 = vdwg.mxu0
    %s465 = scalar_lea.vmem [#allocation7], 32
    %v466 = vld [vmem:[%s465] sm:$0xff]
    %v467 = vld [vmem:[%s465 + $0x8] sm:$0xff]
    %v468 = vld [vmem:[%s465 + $0x10] sm:$0xff]
    %v469 = vld [vmem:[%s465 + $0x18] sm:$0xff]
    %s470 = scalar_lea.vmem %s7, 1
    %v471 = vld [vmem:[%s470] sm:$0x1]
    %v473 = vperm.slane %v471, 0
    %475 = vmatpush.msra.mxu0 0.0
    %476 = vmatpush.msra.mxu0 0.0
    %477 = vmatpush.msra.mxu0 0.0
    %478 = vmatpush.msra.mxu0 0.0
    %479 = vmatpush.msra.mxu0 0.0
    %480 = vmatpush.msra.mxu0 0.0
    %481 = vmatpush.msra.mxu0 0.0
    %482 = vmatpush.msra.mxu0 0.0
    %483 = vmatpush.msra.mxu0 0.0
    %484 = vmatpush.msra.mxu0 0.0
    %485 = vmatpush.msra.mxu0 0.0
    %486 = vmatpush.msra.mxu0 0.0
    %487 = vmatpush.msra.mxu0 %v469
    %488 = vmatpush.msra.mxu0 %v468
    %489 = vmatpush.msra.mxu0 %v467
    %490 = vmatpush.msra.mxu0 %v466
    %491 = vmatmul.f32.gmra.mxu0 %v437
    %v492 = vpop.f32.mrf.mxu0
    %v493 = vadd.f32 %v473, %v492
    %494 = vmatmul.f32.gmra.mxu0 %v440
    %v495 = vpop.f32.mrf.mxu0
    %v496 = vadd.f32 %v473, %v495
    %497 = vdwg.mxu0
    %s498 = scalar_lea.vmem [#allocation7], 64
    %v499 = vld [vmem:[%s498] sm:$0xff]
    %v500 = vld [vmem:[%s498 + $0x8] sm:$0xff]
    %v501 = vld [vmem:[%s498 + $0x10] sm:$0xff]
    %v502 = vld [vmem:[%s498 + $0x18] sm:$0xff]
    %s503 = scalar_lea.vmem %s7, 2
    %v504 = vld [vmem:[%s503] sm:$0x1]
    %v506 = vperm.slane %v504, 0
    %508 = vmatpush.msra.mxu0 0.0
    %509 = vmatpush.msra.mxu0 0.0
    %510 = vmatpush.msra.mxu0 0.0
    %511 = vmatpush.msra.mxu0 0.0
    %512 = vmatpush.msra.mxu0 0.0
    %513 = vmatpush.msra.mxu0 0.0
    %514 = vmatpush.msra.mxu0 0.0
    %515 = vmatpush.msra.mxu0 0.0
    %516 = vmatpush.msra.mxu0 0.0
    %517 = vmatpush.msra.mxu0 0.0
    %518 = vmatpush.msra.mxu0 0.0
    %519 = vmatpush.msra.mxu0 0.0
    %520 = vmatpush.msra.mxu0 %v502
    %521 = vmatpush.msra.mxu0 %v501
    %522 = vmatpush.msra.mxu0 %v500
    %523 = vmatpush.msra.mxu0 %v499
    %524 = vmatmul.f32.gmra.mxu0 %v437
    %v525 = vpop.f32.mrf.mxu0
    %v526 = vadd.f32 %v506, %v525
    %527 = vmatmul.f32.gmra.mxu0 %v440
    %v528 = vpop.f32.mrf.mxu0
    %v529 = vadd.f32 %v506, %v528
    %530 = vdwg.mxu0
    %v531 = vld [vmem:[#allocation8] sm:$0xff]
    %v532 = vld [vmem:[#allocation8 + $0x8] sm:$0xff]
    %v533 = vld [vmem:[#allocation8 + $0x10] sm:$0xff]
    %v534 = vld [vmem:[#allocation8 + $0x18] sm:$0xff]
    %s535 = scalar_lea.vmem [#allocation8], 32
    %v536 = vld [vmem:[%s535] sm:$0xff]
    %v537 = vld [vmem:[%s535 + $0x8] sm:$0xff]
    %v538 = vld [vmem:[%s535 + $0x10] sm:$0xff]
    %v539 = vld [vmem:[%s535 + $0x18] sm:$0xff]
    %s540 = scalar_lea.vmem [#allocation8], 64
    %v541 = vld [vmem:[%s540] sm:$0xff]
    %v542 = vld [vmem:[%s540 + $0x8] sm:$0xff]
    %v543 = vld [vmem:[%s540 + $0x10] sm:$0xff]
    %v544 = vld [vmem:[%s540 + $0x18] sm:$0xff]
    %v545 = vld [vmem:[%s8] sm:$0x1]
    %s546 = scalar_lea.vmem %s8, 1
    %v547 = vld [vmem:[%s546] sm:$0x1]
    %s548 = scalar_lea.vmem %s8, 2
    %v549 = vld [vmem:[%s548] sm:$0x1]
    %v551 = vperm.slane %v545, 0
    %553 = vmatpush.msra.mxu0 0.0
    %554 = vmatpush.msra.mxu0 0.0
    %555 = vmatpush.msra.mxu0 0.0
    %556 = vmatpush.msra.mxu0 0.0
    %557 = vmatpush.msra.mxu0 0.0
    %558 = vmatpush.msra.mxu0 0.0
    %559 = vmatpush.msra.mxu0 0.0
    %560 = vmatpush.msra.mxu0 0.0
    %561 = vmatpush.msra.mxu0 0.0
    %562 = vmatpush.msra.mxu0 0.0
    %563 = vmatpush.msra.mxu0 0.0
    %564 = vmatpush.msra.mxu0 0.0
    %565 = vmatpush.msra.mxu0 %v534
    %566 = vmatpush.msra.mxu0 %v533
    %567 = vmatpush.msra.mxu0 %v532
    %568 = vmatpush.msra.mxu0 %v531
    %569 = vmatmul.f32.gmra.mxu0 %v296
    %v570 = vpop.f32.mrf.mxu0
    %v571 = vadd.f32 %v551, %v570
    %572 = vmatmul.f32.gmra.mxu0 %v299
    %v573 = vpop.f32.mrf.mxu0
    %v574 = vadd.f32 %v551, %v573
    %575 = vdwg.mxu0
    %v577 = vperm.slane %v547, 0
    %579 = vmatpush.msra.mxu0 0.0
    %580 = vmatpush.msra.mxu0 0.0
    %581 = vmatpush.msra.mxu0 0.0
    %582 = vmatpush.msra.mxu0 0.0
    %583 = vmatpush.msra.mxu0 0.0
    %584 = vmatpush.msra.mxu0 0.0
    %585 = vmatpush.msra.mxu0 0.0
    %586 = vmatpush.msra.mxu0 0.0
    %587 = vmatpush.msra.mxu0 0.0
    %588 = vmatpush.msra.mxu0 0.0
    %589 = vmatpush.msra.mxu0 0.0
    %590 = vmatpush.msra.mxu0 0.0
    %591 = vmatpush.msra.mxu0 %v539
    %592 = vmatpush.msra.mxu0 %v538
    %593 = vmatpush.msra.mxu0 %v537
    %594 = vmatpush.msra.mxu0 %v536
    %595 = vmatmul.f32.gmra.mxu0 %v296
    %v596 = vpop.f32.mrf.mxu0
    %v597 = vadd.f32 %v577, %v596
    %598 = vmatmul.f32.gmra.mxu0 %v299
    %v599 = vpop.f32.mrf.mxu0
    %v600 = vadd.f32 %v577, %v599
    %601 = vdwg.mxu0
    %v603 = vperm.slane %v549, 0
    %605 = vmatpush.msra.mxu0 0.0
    %606 = vmatpush.msra.mxu0 0.0
    %607 = vmatpush.msra.mxu0 0.0
    %608 = vmatpush.msra.mxu0 0.0
    %609 = vmatpush.msra.mxu0 0.0
    %610 = vmatpush.msra.mxu0 0.0
    %611 = vmatpush.msra.mxu0 0.0
    %612 = vmatpush.msra.mxu0 0.0
    %613 = vmatpush.msra.mxu0 0.0
    %614 = vmatpush.msra.mxu0 0.0
    %615 = vmatpush.msra.mxu0 0.0
    %616 = vmatpush.msra.mxu0 0.0
    %617 = vmatpush.msra.mxu0 %v544
    %618 = vmatpush.msra.mxu0 %v543
    %619 = vmatpush.msra.mxu0 %v542
    %620 = vmatpush.msra.mxu0 %v541
    %621 = vmatmul.f32.gmra.mxu0 %v296
    %v622 = vpop.f32.mrf.mxu0
    %v623 = vadd.f32 %v603, %v622
    %624 = vmatmul.f32.gmra.mxu0 %v299
    %v625 = vpop.f32.mrf.mxu0
    %v626 = vadd.f32 %v603, %v625
    %627 = vdwg.mxu0
    %v628 = vadd.f32 %v460, %v571
    %v629 = vadd.f32 %v463, %v574
    %v630 = vxor.u32 %v628, 2147483648
    %v631 = vxor.u32 %v629, 2147483648
    %v632 = vmul.f32 %v630, 1.442695
    %v633 = vpow.pop %v632
    %v634 = vmul.f32 %v631, 1.442695
    %v635 = vpow.pop %v634
    %v636 = vadd.f32 %v633, 1.0
    %v637 = vadd.f32 %v635, 1.0
    %v638 = vrcp.pop %v636
    %v639 = vmul.f32 %v636, %v638
    %v640 = vsub.f32 1.0, %v639
    %v641 = vmul.f32 %v638, %v640
    %v642 = vadd.f32 %v638, %v641
    %vm643 = vweird.f32 %v636
    %vm644 = vweird.f32 %v638
    %vm645 = vmor %vm643, %vm644
    %v646 = vsel %vm645, %v638, %v642
    %v647 = vand.u32 2147483647, %v636
    %vm648 = vcmp.eq.f32.partialorder %v647, 8.507059e+37
    %v649 = vand.u32 %v636, 2147483648
    %v650 = vor.u32 1.1754944e-38, %v649
    %v651 = vsel %vm648, %v650, %v646
    %v652 = vmul.f32 1.0, %v651
    %v653 = vrcp.pop %v637
    %v654 = vmul.f32 %v637, %v653
    %v655 = vsub.f32 1.0, %v654
    %v656 = vmul.f32 %v653, %v655
    %v657 = vadd.f32 %v653, %v656
    %vm658 = vweird.f32 %v637
    %vm659 = vweird.f32 %v653
    %vm660 = vmor %vm658, %vm659
    %v661 = vsel %vm660, %v653, %v657
    %v662 = vand.u32 2147483647, %v637
    %vm663 = vcmp.eq.f32.partialorder %v662, 8.507059e+37
    %v664 = vand.u32 %v637, 2147483648
    %v665 = vor.u32 1.1754944e-38, %v664
    %v666 = vsel %vm663, %v665, %v661
    %v667 = vmul.f32 1.0, %v666
    %v668 = vadd.f32 %v493, %v597
    %v669 = vadd.f32 %v496, %v600
    %v670 = vxor.u32 %v668, 2147483648
    %v671 = vxor.u32 %v669, 2147483648
    %v672 = vmul.f32 %v670, 1.442695
    %v673 = vpow.pop %v672
    %v674 = vmul.f32 %v671, 1.442695
    %v675 = vpow.pop %v674
    %v676 = vadd.f32 %v673, 1.0
    %v677 = vadd.f32 %v675, 1.0
    %v678 = vrcp.pop %v676
    %v679 = vmul.f32 %v676, %v678
    %v680 = vsub.f32 1.0, %v679
    %v681 = vmul.f32 %v678, %v680
    %v682 = vadd.f32 %v678, %v681
    %vm683 = vweird.f32 %v676
    %vm684 = vweird.f32 %v678
    %vm685 = vmor %vm683, %vm684
    %v686 = vsel %vm685, %v678, %v682
    %v687 = vand.u32 2147483647, %v676
    %vm688 = vcmp.eq.f32.partialorder %v687, 8.507059e+37
    %v689 = vand.u32 %v676, 2147483648
    %v690 = vor.u32 1.1754944e-38, %v689
    %v691 = vsel %vm688, %v690, %v686
    %v692 = vmul.f32 1.0, %v691
    %v693 = vrcp.pop %v677
    %v694 = vmul.f32 %v677, %v693
    %v695 = vsub.f32 1.0, %v694
    %v696 = vmul.f32 %v693, %v695
    %v697 = vadd.f32 %v693, %v696
    %vm698 = vweird.f32 %v677
    %vm699 = vweird.f32 %v693
    %vm700 = vmor %vm698, %vm699
    %v701 = vsel %vm700, %v693, %v697
    %v702 = vand.u32 2147483647, %v677
    %vm703 = vcmp.eq.f32.partialorder %v702, 8.507059e+37
    %v704 = vand.u32 %v677, 2147483648
    %v705 = vor.u32 1.1754944e-38, %v704
    %v706 = vsel %vm703, %v705, %v701
    %v707 = vmul.f32 1.0, %v706
    %v708 = vmul.f32 %v652, %v623
    %v709 = vmul.f32 %v667, %v626
    %v710 = vadd.f32 %v526, %v708
    %v711 = vadd.f32 %v529, %v709
    %v712 = vtanh.pop %v710
    %v713 = vtanh.pop %v711
    %v714 = vsub.f32 1.0, %v692
    %v715 = vsub.f32 1.0, %v707
    %v716 = vmul.f32 %v714, %v712
    %v717 = vmul.f32 %v715, %v713
    %v718 = vmul.f32 %v692, %v286
    %v719 = vmul.f32 %v707, %v289
    %v720 = vadd.f32 %v716, %v718
    %v721 = vadd.f32 %v717, %v719
    %v723 = vsel %vm261, %v720, 0
    %v726 = vsel %vm261, %v721, 0
    %728 = vmatpush.msra.mxu0 0.0
    %729 = vmatpush.msra.mxu0 0.0
    %730 = vmatpush.msra.mxu0 0.0
    %731 = vmatpush.msra.mxu0 0.0
    %732 = vmatpush.msra.mxu0 0.0
    %733 = vmatpush.msra.mxu0 0.0
    %734 = vmatpush.msra.mxu0 0.0
    %735 = vmatpush.msra.mxu0 0.0
    %736 = vmatpush.msra.mxu0 0.0
    %737 = vmatpush.msra.mxu0 0.0
    %738 = vmatpush.msra.mxu0 0.0
    %739 = vmatpush.msra.mxu0 0.0
    %740 = vmatpush.msra.mxu0 %v534
    %741 = vmatpush.msra.mxu0 %v533
    %742 = vmatpush.msra.mxu0 %v532
    %743 = vmatpush.msra.mxu0 %v531
    %744 = vmatmul.f32.gmra.mxu0 %v723
    %v745 = vpop.f32.mrf.mxu0
    %v746 = vadd.f32 %v551, %v745
    %747 = vmatmul.f32.gmra.mxu0 %v726
    %v748 = vpop.f32.mrf.mxu0
    %v749 = vadd.f32 %v551, %v748
    %750 = vdwg.mxu0
    %751 = vmatpush.msra.mxu0 0.0
    %752 = vmatpush.msra.mxu0 0.0
    %753 = vmatpush.msra.mxu0 0.0
    %754 = vmatpush.msra.mxu0 0.0
    %755 = vmatpush.msra.mxu0 0.0
    %756 = vmatpush.msra.mxu0 0.0
    %757 = vmatpush.msra.mxu0 0.0
    %758 = vmatpush.msra.mxu0 0.0
    %759 = vmatpush.msra.mxu0 0.0
    %760 = vmatpush.msra.mxu0 0.0
    %761 = vmatpush.msra.mxu0 0.0
    %762 = vmatpush.msra.mxu0 0.0
    %763 = vmatpush.msra.mxu0 %v539
    %764 = vmatpush.msra.mxu0 %v538
    %765 = vmatpush.msra.mxu0 %v537
    %766 = vmatpush.msra.mxu0 %v536
    %767 = vmatmul.f32.gmra.mxu0 %v723
    %v768 = vpop.f32.mrf.mxu0
    %v769 = vadd.f32 %v577, %v768
    %770 = vmatmul.f32.gmra.mxu0 %v726
    %v771 = vpop.f32.mrf.mxu0
    %v772 = vadd.f32 %v577, %v771
    %773 = vdwg.mxu0
    %774 = vmatpush.msra.mxu0 0.0
    %775 = vmatpush.msra.mxu0 0.0
    %776 = vmatpush.msra.mxu0 0.0
    %777 = vmatpush.msra.mxu0 0.0
    %778 = vmatpush.msra.mxu0 0.0
    %779 = vmatpush.msra.mxu0 0.0
    %780 = vmatpush.msra.mxu0 0.0
    %781 = vmatpush.msra.mxu0 0.0
    %782 = vmatpush.msra.mxu0 0.0
    %783 = vmatpush.msra.mxu0 0.0
    %784 = vmatpush.msra.mxu0 0.0
    %785 = vmatpush.msra.mxu0 0.0
    %786 = vmatpush.msra.mxu0 %v544
    %787 = vmatpush.msra.mxu0 %v543
    %788 = vmatpush.msra.mxu0 %v542
    %789 = vmatpush.msra.mxu0 %v541
    %790 = vmatmul.f32.gmra.mxu0 %v723
    %v791 = vpop.f32.mrf.mxu0
    %v792 = vadd.f32 %v603, %v791
    %793 = vmatmul.f32.gmra.mxu0 %v726
    %v794 = vpop.f32.mrf.mxu0
    %v795 = vadd.f32 %v603, %v794
    %796 = vdwg.mxu0
    %v797 = vadd.f32 %v460, %v746
    %v798 = vadd.f32 %v463, %v749
    %v799 = vxor.u32 %v797, 2147483648
    %v800 = vxor.u32 %v798, 2147483648
    %v801 = vmul.f32 %v799, 1.442695
    %v802 = vpow.pop %v801
    %v803 = vmul.f32 %v800, 1.442695
    %v804 = vpow.pop %v803
    %v805 = vadd.f32 %v802, 1.0
    %v806 = vadd.f32 %v804, 1.0
    %v807 = vrcp.pop %v805
    %v808 = vmul.f32 %v805, %v807
    %v809 = vsub.f32 1.0, %v808
    %v810 = vmul.f32 %v807, %v809
    %v811 = vadd.f32 %v807, %v810
    %vm812 = vweird.f32 %v805
    %vm813 = vweird.f32 %v807
    %vm814 = vmor %vm812, %vm813
    %v815 = vsel %vm814, %v807, %v811
    %v816 = vand.u32 2147483647, %v805
    %vm817 = vcmp.eq.f32.partialorder %v816, 8.507059e+37
    %v818 = vand.u32 %v805, 2147483648
    %v819 = vor.u32 1.1754944e-38, %v818
    %v820 = vsel %vm817, %v819, %v815
    %v821 = vmul.f32 1.0, %v820
    %v822 = vrcp.pop %v806
    %v823 = vmul.f32 %v806, %v822
    %v824 = vsub.f32 1.0, %v823
    %v825 = vmul.f32 %v822, %v824
    %v826 = vadd.f32 %v822, %v825
    %vm827 = vweird.f32 %v806
    %vm828 = vweird.f32 %v822
    %vm829 = vmor %vm827, %vm828
    %v830 = vsel %vm829, %v822, %v826
    %v831 = vand.u32 2147483647, %v806
    %vm832 = vcmp.eq.f32.partialorder %v831, 8.507059e+37
    %v833 = vand.u32 %v806, 2147483648
    %v834 = vor.u32 1.1754944e-38, %v833
    %v835 = vsel %vm832, %v834, %v830
    %v836 = vmul.f32 1.0, %v835
    %v837 = vadd.f32 %v493, %v769
    %v838 = vadd.f32 %v496, %v772
    %v839 = vxor.u32 %v837, 2147483648
    %v840 = vxor.u32 %v838, 2147483648
    %v841 = vmul.f32 %v839, 1.442695
    %v842 = vpow.pop %v841
    %v843 = vmul.f32 %v840, 1.442695
    %v844 = vpow.pop %v843
    %v845 = vadd.f32 %v842, 1.0
    %v846 = vadd.f32 %v844, 1.0
    %v847 = vrcp.pop %v845
    %v848 = vmul.f32 %v845, %v847
    %v849 = vsub.f32 1.0, %v848
    %v850 = vmul.f32 %v847, %v849
    %v851 = vadd.f32 %v847, %v850
    %vm852 = vweird.f32 %v845
    %vm853 = vweird.f32 %v847
    %vm854 = vmor %vm852, %vm853
    %v855 = vsel %vm854, %v847, %v851
    %v856 = vand.u32 2147483647, %v845
    %vm857 = vcmp.eq.f32.partialorder %v856, 8.507059e+37
    %v858 = vand.u32 %v845, 2147483648
    %v859 = vor.u32 1.1754944e-38, %v858
    %v860 = vsel %vm857, %v859, %v855
    %v861 = vmul.f32 1.0, %v860
    %v862 = vrcp.pop %v846
    %v863 = vmul.f32 %v846, %v862
    %v864 = vsub.f32 1.0, %v863
    %v865 = vmul.f32 %v862, %v864
    %v866 = vadd.f32 %v862, %v865
    %vm867 = vweird.f32 %v846
    %vm868 = vweird.f32 %v862
    %vm869 = vmor %vm867, %vm868
    %v870 = vsel %vm869, %v862, %v866
    %v871 = vand.u32 2147483647, %v846
    %vm872 = vcmp.eq.f32.partialorder %v871, 8.507059e+37
    %v873 = vand.u32 %v846, 2147483648
    %v874 = vor.u32 1.1754944e-38, %v873
    %v875 = vsel %vm872, %v874, %v870
    %v876 = vmul.f32 1.0, %v875
    %v877 = vmul.f32 %v821, %v792
    %v878 = vmul.f32 %v836, %v795
    %v879 = vadd.f32 %v526, %v877
    %v880 = vadd.f32 %v529, %v878
    %v881 = vtanh.pop %v879
    %v882 = vtanh.pop %v880
    %v883 = vsub.f32 1.0, %v861
    %v884 = vsub.f32 1.0, %v876
    %v885 = vmul.f32 %v883, %v881
    %v886 = vmul.f32 %v884, %v882
    %v887 = vmul.f32 %v861, %v720
    %v888 = vmul.f32 %v876, %v721
    %v889 = vadd.f32 %v885, %v887
    %v890 = vadd.f32 %v886, %v888
    %v891 = vld [vmem:[#allocation10] sm:$0xff]
    %v892 = vld [vmem:[#allocation10 + $0x8] sm:$0xff]
    %v893 = vld [vmem:[#allocation10 + $0x10] sm:$0xff]
    %v894 = vld [vmem:[#allocation10 + $0x18] sm:$0xff]
    %v896 = vsel %vm261, %v889, 0
    %v899 = vsel %vm261, %v890, 0
    %901 = vmatpush.msra.mxu0 0.0
    %902 = vmatpush.msra.mxu0 0.0
    %903 = vmatpush.msra.mxu0 0.0
    %904 = vmatpush.msra.mxu0 0.0
    %905 = vmatpush.msra.mxu0 0.0
    %906 = vmatpush.msra.mxu0 0.0
    %907 = vmatpush.msra.mxu0 0.0
    %908 = vmatpush.msra.mxu0 0.0
    %909 = vmatpush.msra.mxu0 0.0
    %910 = vmatpush.msra.mxu0 0.0
    %911 = vmatpush.msra.mxu0 0.0
    %912 = vmatpush.msra.mxu0 0.0
    %913 = vmatpush.msra.mxu0 %v894
    %914 = vmatpush.msra.mxu0 %v893
    %915 = vmatpush.msra.mxu0 %v892
    %916 = vmatpush.msra.mxu0 %v891
    %917 = vmatmul.f32.gmra.mxu0 %v896
    %v918 = vpop.f32.mrf.mxu0
    %v919 = vadd.f32 0.0, %v918
    %920 = vmatmul.f32.gmra.mxu0 %v899
    %v921 = vpop.f32.mrf.mxu0
    %v922 = vadd.f32 0.0, %v921
    %923 = vdwg.mxu0
    %v924 = vmul.f32 %v919, %v329
    %v925 = vmul.f32 %v922, %v334
    %s926 = scalar_lea.vmem [#allocation10], 32
    %v927 = vld [vmem:[%s926] sm:$0xff]
    %v928 = vld [vmem:[%s926 + $0x8] sm:$0xff]
    %v929 = vld [vmem:[%s926 + $0x10] sm:$0xff]
    %v930 = vld [vmem:[%s926 + $0x18] sm:$0xff]
    %931 = vmatpush.msra.mxu0 0.0
    %932 = vmatpush.msra.mxu0 0.0
    %933 = vmatpush.msra.mxu0 0.0
    %934 = vmatpush.msra.mxu0 0.0
    %935 = vmatpush.msra.mxu0 0.0
    %936 = vmatpush.msra.mxu0 0.0
    %937 = vmatpush.msra.mxu0 0.0
    %938 = vmatpush.msra.mxu0 0.0
    %939 = vmatpush.msra.mxu0 0.0
    %940 = vmatpush.msra.mxu0 0.0
    %941 = vmatpush.msra.mxu0 0.0
    %942 = vmatpush.msra.mxu0 0.0
    %943 = vmatpush.msra.mxu0 %v930
    %944 = vmatpush.msra.mxu0 %v929
    %945 = vmatpush.msra.mxu0 %v928
    %946 = vmatpush.msra.mxu0 %v927
    %947 = vmatmul.f32.gmra.mxu0 %v896
    %v948 = vpop.f32.mrf.mxu0
    %v949 = vadd.f32 0.0, %v948
    %950 = vmatmul.f32.gmra.mxu0 %v899
    %v951 = vpop.f32.mrf.mxu0
    %v952 = vadd.f32 0.0, %v951
    %953 = vdwg.mxu0
    %v954 = vmul.f32 %v949, %v372
    %v955 = vmul.f32 %v952, %v377
    %v956 = vmax.f32 %v924, %v954
    %v957 = vmax.f32 %v925, %v955
    %s958 = scalar_lea.vmem [#allocation10], 64
    %v959 = vld [vmem:[%s958] sm:$0xff]
    %v960 = vld [vmem:[%s958 + $0x8] sm:$0xff]
    %v961 = vld [vmem:[%s958 + $0x10] sm:$0xff]
    %v962 = vld [vmem:[%s958 + $0x18] sm:$0xff]
    %963 = vmatpush.msra.mxu0 0.0
    %964 = vmatpush.msra.mxu0 0.0
    %965 = vmatpush.msra.mxu0 0.0
    %966 = vmatpush.msra.mxu0 0.0
    %967 = vmatpush.msra.mxu0 0.0
    %968 = vmatpush.msra.mxu0 0.0
    %969 = vmatpush.msra.mxu0 0.0
    %970 = vmatpush.msra.mxu0 0.0
    %971 = vmatpush.msra.mxu0 0.0
    %972 = vmatpush.msra.mxu0 0.0
    %973 = vmatpush.msra.mxu0 0.0
    %974 = vmatpush.msra.mxu0 0.0
    %975 = vmatpush.msra.mxu0 %v962
    %976 = vmatpush.msra.mxu0 %v961
    %977 = vmatpush.msra.mxu0 %v960
    %978 = vmatpush.msra.mxu0 %v959
    %979 = vmatmul.f32.gmra.mxu0 %v896
    %v980 = vpop.f32.mrf.mxu0
    %v981 = vadd.f32 0.0, %v980
    %982 = vmatmul.f32.gmra.mxu0 %v899
    %v983 = vpop.f32.mrf.mxu0
    %v984 = vadd.f32 0.0, %v983
    %985 = vdwg.mxu0
    %v986 = vmul.f32 %v981, %v417
    %v987 = vmul.f32 %v984, %v422
    %v988 = vmax.f32 %v956, %v986
    %v989 = vmax.f32 %v957, %v987
    %v990 = vld [vmem:[#allocation11] sm:$0xff]
    %v991 = vld [vmem:[#allocation11 + $0x8] sm:$0xff]
    %v992 = vld [vmem:[#allocation11 + $0x10] sm:$0xff]
    %v993 = vld [vmem:[#allocation11 + $0x18] sm:$0xff]
    %v994 = vld [vmem:[%s13] sm:$0x1]
    %v996 = vperm.slane %v994, 0
    %v999 = vsel %vm261, %v988, 0
    %v1002 = vsel %vm261, %v989, 0
    %1004 = vmatpush.msra.mxu0 0.0
    %1005 = vmatpush.msra.mxu0 0.0
    %1006 = vmatpush.msra.mxu0 0.0
    %1007 = vmatpush.msra.mxu0 0.0
    %1008 = vmatpush.msra.mxu0 0.0
    %1009 = vmatpush.msra.mxu0 0.0
    %1010 = vmatpush.msra.mxu0 0.0
    %1011 = vmatpush.msra.mxu0 0.0
    %1012 = vmatpush.msra.mxu0 0.0
    %1013 = vmatpush.msra.mxu0 0.0
    %1014 = vmatpush.msra.mxu0 0.0
    %1015 = vmatpush.msra.mxu0 0.0
    %1016 = vmatpush.msra.mxu0 %v993
    %1017 = vmatpush.msra.mxu0 %v992
    %1018 = vmatpush.msra.mxu0 %v991
    %1019 = vmatpush.msra.mxu0 %v990
    %1020 = vmatmul.f32.gmra.mxu0 %v999
    %v1021 = vpop.f32.mrf.mxu0
    %v1022 = vadd.f32 %v996, %v1021
    %1023 = vmatmul.f32.gmra.mxu0 %v1002
    %v1024 = vpop.f32.mrf.mxu0
    %v1025 = vadd.f32 %v996, %v1024
    %1026 = vdwg.mxu0
    %v1027 = vld [vmem:[#allocation13] sm:$0xff]
    %v1028 = vld [vmem:[#allocation13 + $0x8] sm:$0xff]
    %v1029 = vld [vmem:[#allocation13 + $0x10] sm:$0xff]
    %v1030 = vld [vmem:[#allocation13 + $0x18] sm:$0xff]
    %1031 = vmatpush.msra.mxu0 0.0
    %1032 = vmatpush.msra.mxu0 0.0
    %1033 = vmatpush.msra.mxu0 0.0
    %1034 = vmatpush.msra.mxu0 0.0
    %1035 = vmatpush.msra.mxu0 0.0
    %1036 = vmatpush.msra.mxu0 0.0
    %1037 = vmatpush.msra.mxu0 0.0
    %1038 = vmatpush.msra.mxu0 0.0
    %1039 = vmatpush.msra.mxu0 0.0
    %1040 = vmatpush.msra.mxu0 0.0
    %1041 = vmatpush.msra.mxu0 0.0
    %1042 = vmatpush.msra.mxu0 0.0
    %1043 = vmatpush.msra.mxu0 %v1030
    %1044 = vmatpush.msra.mxu0 %v1029
    %1045 = vmatpush.msra.mxu0 %v1028
    %1046 = vmatpush.msra.mxu0 %v1027
    %1047 = vmatmul.f32.gmra.mxu0 %v296
    %v1048 = vpop.f32.mrf.mxu0
    %v1049 = vadd.f32 0.0, %v1048
    %1050 = vmatmul.f32.gmra.mxu0 %v299
    %v1051 = vpop.f32.mrf.mxu0
    %v1052 = vadd.f32 0.0, %v1051
    %1053 = vdwg.mxu0
    %v1054 = vadd.f32 %v1022, %v1049
    %v1055 = vadd.f32 %v1025, %v1052
    %s1056 = scalar_lea.vmem [#allocation11], 32
    %v1057 = vld [vmem:[%s1056] sm:$0xff]
    %v1058 = vld [vmem:[%s1056 + $0x8] sm:$0xff]
    %v1059 = vld [vmem:[%s1056 + $0x10] sm:$0xff]
    %v1060 = vld [vmem:[%s1056 + $0x18] sm:$0xff]
    %s1061 = scalar_lea.vmem %s13, 1
    %v1062 = vld [vmem:[%s1061] sm:$0x1]
    %v1064 = vperm.slane %v1062, 0
    %1066 = vmatpush.msra.mxu0 0.0
    %1067 = vmatpush.msra.mxu0 0.0
    %1068 = vmatpush.msra.mxu0 0.0
    %1069 = vmatpush.msra.mxu0 0.0
    %1070 = vmatpush.msra.mxu0 0.0
    %1071 = vmatpush.msra.mxu0 0.0
    %1072 = vmatpush.msra.mxu0 0.0
    %1073 = vmatpush.msra.mxu0 0.0
    %1074 = vmatpush.msra.mxu0 0.0
    %1075 = vmatpush.msra.mxu0 0.0
    %1076 = vmatpush.msra.mxu0 0.0
    %1077 = vmatpush.msra.mxu0 0.0
    %1078 = vmatpush.msra.mxu0 %v1060
    %1079 = vmatpush.msra.mxu0 %v1059
    %1080 = vmatpush.msra.mxu0 %v1058
    %1081 = vmatpush.msra.mxu0 %v1057
    %1082 = vmatmul.f32.gmra.mxu0 %v999
    %v1083 = vpop.f32.mrf.mxu0
    %v1084 = vadd.f32 %v1064, %v1083
    %1085 = vmatmul.f32.gmra.mxu0 %v1002
    %v1086 = vpop.f32.mrf.mxu0
    %v1087 = vadd.f32 %v1064, %v1086
    %1088 = vdwg.mxu0
    %s1089 = scalar_lea.vmem [#allocation13], 32
    %v1090 = vld [vmem:[%s1089] sm:$0xff]
    %v1091 = vld [vmem:[%s1089 + $0x8] sm:$0xff]
    %v1092 = vld [vmem:[%s1089 + $0x10] sm:$0xff]
    %v1093 = vld [vmem:[%s1089 + $0x18] sm:$0xff]
    %1094 = vmatpush.msra.mxu0 0.0
    %1095 = vmatpush.msra.mxu0 0.0
    %1096 = vmatpush.msra.mxu0 0.0
    %1097 = vmatpush.msra.mxu0 0.0
    %1098 = vmatpush.msra.mxu0 0.0
    %1099 = vmatpush.msra.mxu0 0.0
    %1100 = vmatpush.msra.mxu0 0.0
    %1101 = vmatpush.msra.mxu0 0.0
    %1102 = vmatpush.msra.mxu0 0.0
    %1103 = vmatpush.msra.mxu0 0.0
    %1104 = vmatpush.msra.mxu0 0.0
    %1105 = vmatpush.msra.mxu0 0.0
    %1106 = vmatpush.msra.mxu0 %v1093
    %1107 = vmatpush.msra.mxu0 %v1092
    %1108 = vmatpush.msra.mxu0 %v1091
    %1109 = vmatpush.msra.mxu0 %v1090
    %1110 = vmatmul.f32.gmra.mxu0 %v296
    %v1111 = vpop.f32.mrf.mxu0
    %v1112 = vadd.f32 0.0, %v1111
    %1113 = vmatmul.f32.gmra.mxu0 %v299
    %v1114 = vpop.f32.mrf.mxu0
    %v1115 = vadd.f32 0.0, %v1114
    %1116 = vdwg.mxu0
    %v1117 = vadd.f32 %v1084, %v1112
    %v1118 = vadd.f32 %v1087, %v1115
    %s1119 = scalar_lea.vmem [#allocation11], 64
    %v1120 = vld [vmem:[%s1119] sm:$0xff]
    %v1121 = vld [vmem:[%s1119 + $0x8] sm:$0xff]
    %v1122 = vld [vmem:[%s1119 + $0x10] sm:$0xff]
    %v1123 = vld [vmem:[%s1119 + $0x18] sm:$0xff]
    %s1124 = scalar_lea.vmem %s13, 2
    %v1125 = vld [vmem:[%s1124] sm:$0x1]
    %v1127 = vperm.slane %v1125, 0
    %1129 = vmatpush.msra.mxu0 0.0
    %1130 = vmatpush.msra.mxu0 0.0
    %1131 = vmatpush.msra.mxu0 0.0
    %1132 = vmatpush.msra.mxu0 0.0
    %1133 = vmatpush.msra.mxu0 0.0
    %1134 = vmatpush.msra.mxu0 0.0
    %1135 = vmatpush.msra.mxu0 0.0
    %1136 = vmatpush.msra.mxu0 0.0
    %1137 = vmatpush.msra.mxu0 0.0
    %1138 = vmatpush.msra.mxu0 0.0
    %1139 = vmatpush.msra.mxu0 0.0
    %1140 = vmatpush.msra.mxu0 0.0
    %1141 = vmatpush.msra.mxu0 %v1123
    %1142 = vmatpush.msra.mxu0 %v1122
    %1143 = vmatpush.msra.mxu0 %v1121
    %1144 = vmatpush.msra.mxu0 %v1120
    %1145 = vmatmul.f32.gmra.mxu0 %v999
    %v1146 = vpop.f32.mrf.mxu0
    %v1147 = vadd.f32 %v1127, %v1146
    %1148 = vmatmul.f32.gmra.mxu0 %v1002
    %v1149 = vpop.f32.mrf.mxu0
    %v1150 = vadd.f32 %v1127, %v1149
    %1151 = vdwg.mxu0
    %s1152 = scalar_lea.vmem [#allocation13], 64
    %v1153 = vld [vmem:[%s1152] sm:$0xff]
    %v1154 = vld [vmem:[%s1152 + $0x8] sm:$0xff]
    %v1155 = vld [vmem:[%s1152 + $0x10] sm:$0xff]
    %v1156 = vld [vmem:[%s1152 + $0x18] sm:$0xff]
    %1157 = vmatpush.msra.mxu0 0.0
    %1158 = vmatpush.msra.mxu0 0.0
    %1159 = vmatpush.msra.mxu0 0.0
    %1160 = vmatpush.msra.mxu0 0.0
    %1161 = vmatpush.msra.mxu0 0.0
    %1162 = vmatpush.msra.mxu0 0.0
    %1163 = vmatpush.msra.mxu0 0.0
    %1164 = vmatpush.msra.mxu0 0.0
    %1165 = vmatpush.msra.mxu0 0.0
    %1166 = vmatpush.msra.mxu0 0.0
    %1167 = vmatpush.msra.mxu0 0.0
    %1168 = vmatpush.msra.mxu0 0.0
    %1169 = vmatpush.msra.mxu0 %v1156
    %1170 = vmatpush.msra.mxu0 %v1155
    %1171 = vmatpush.msra.mxu0 %v1154
    %1172 = vmatpush.msra.mxu0 %v1153
    %1173 = vmatmul.f32.gmra.mxu0 %v296
    %v1174 = vpop.f32.mrf.mxu0
    %v1175 = vadd.f32 0.0, %v1174
    %1176 = vmatmul.f32.gmra.mxu0 %v299
    %v1177 = vpop.f32.mrf.mxu0
    %v1178 = vadd.f32 0.0, %v1177
    %1179 = vdwg.mxu0
    %v1180 = vadd.f32 %v1147, %v1175
    %v1181 = vadd.f32 %v1150, %v1178
    %v1182 = vld [vmem:[#allocation14] sm:$0xff]
    %v1183 = vld [vmem:[#allocation14 + $0x8] sm:$0xff]
    %v1184 = vld [vmem:[#allocation14 + $0x10] sm:$0xff]
    %v1185 = vld [vmem:[#allocation14 + $0x18] sm:$0xff]
    %s1186 = scalar_lea.vmem [#allocation14], 32
    %v1187 = vld [vmem:[%s1186] sm:$0xff]
    %v1188 = vld [vmem:[%s1186 + $0x8] sm:$0xff]
    %v1189 = vld [vmem:[%s1186 + $0x10] sm:$0xff]
    %v1190 = vld [vmem:[%s1186 + $0x18] sm:$0xff]
    %s1191 = scalar_lea.vmem [#allocation14], 64
    %v1192 = vld [vmem:[%s1191] sm:$0xff]
    %v1193 = vld [vmem:[%s1191 + $0x8] sm:$0xff]
    %v1194 = vld [vmem:[%s1191 + $0x10] sm:$0xff]
    %v1195 = vld [vmem:[%s1191 + $0x18] sm:$0xff]
    %v1196 = vld [vmem:[%s14] sm:$0x1]
    %s1197 = scalar_lea.vmem %s14, 1
    %v1198 = vld [vmem:[%s1197] sm:$0x1]
    %s1199 = scalar_lea.vmem %s14, 2
    %v1200 = vld [vmem:[%s1199] sm:$0x1]
    %v1202 = vperm.slane %v1196, 0
    %1204 = vmatpush.msra.mxu0 0.0
    %1205 = vmatpush.msra.mxu0 0.0
    %1206 = vmatpush.msra.mxu0 0.0
    %1207 = vmatpush.msra.mxu0 0.0
    %1208 = vmatpush.msra.mxu0 0.0
    %1209 = vmatpush.msra.mxu0 0.0
    %1210 = vmatpush.msra.mxu0 0.0
    %1211 = vmatpush.msra.mxu0 0.0
    %1212 = vmatpush.msra.mxu0 0.0
    %1213 = vmatpush.msra.mxu0 0.0
    %1214 = vmatpush.msra.mxu0 0.0
    %1215 = vmatpush.msra.mxu0 0.0
    %1216 = vmatpush.msra.mxu0 %v1185
    %1217 = vmatpush.msra.mxu0 %v1184
    %1218 = vmatpush.msra.mxu0 %v1183
    %1219 = vmatpush.msra.mxu0 %v1182
    %1220 = vmatmul.f32.gmra.mxu0 %v896
    %v1221 = vpop.f32.mrf.mxu0
    %v1222 = vadd.f32 %v1202, %v1221
    %1223 = vmatmul.f32.gmra.mxu0 %v899
    %v1224 = vpop.f32.mrf.mxu0
    %v1225 = vadd.f32 %v1202, %v1224
    %1226 = vdwg.mxu0
    %v1228 = vperm.slane %v1198, 0
    %1230 = vmatpush.msra.mxu0 0.0
    %1231 = vmatpush.msra.mxu0 0.0
    %1232 = vmatpush.msra.mxu0 0.0
    %1233 = vmatpush.msra.mxu0 0.0
    %1234 = vmatpush.msra.mxu0 0.0
    %1235 = vmatpush.msra.mxu0 0.0
    %1236 = vmatpush.msra.mxu0 0.0
    %1237 = vmatpush.msra.mxu0 0.0
    %1238 = vmatpush.msra.mxu0 0.0
    %1239 = vmatpush.msra.mxu0 0.0
    %1240 = vmatpush.msra.mxu0 0.0
    %1241 = vmatpush.msra.mxu0 0.0
    %1242 = vmatpush.msra.mxu0 %v1190
    %1243 = vmatpush.msra.mxu0 %v1189
    %1244 = vmatpush.msra.mxu0 %v1188
    %1245 = vmatpush.msra.mxu0 %v1187
    %1246 = vmatmul.f32.gmra.mxu0 %v896
    %v1247 = vpop.f32.mrf.mxu0
    %v1248 = vadd.f32 %v1228, %v1247
    %1249 = vmatmul.f32.gmra.mxu0 %v899
    %v1250 = vpop.f32.mrf.mxu0
    %v1251 = vadd.f32 %v1228, %v1250
    %1252 = vdwg.mxu0
    %v1254 = vperm.slane %v1200, 0
    %1256 = vmatpush.msra.mxu0 0.0
    %1257 = vmatpush.msra.mxu0 0.0
    %1258 = vmatpush.msra.mxu0 0.0
    %1259 = vmatpush.msra.mxu0 0.0
    %1260 = vmatpush.msra.mxu0 0.0
    %1261 = vmatpush.msra.mxu0 0.0
    %1262 = vmatpush.msra.mxu0 0.0
    %1263 = vmatpush.msra.mxu0 0.0
    %1264 = vmatpush.msra.mxu0 0.0
    %1265 = vmatpush.msra.mxu0 0.0
    %1266 = vmatpush.msra.mxu0 0.0
    %1267 = vmatpush.msra.mxu0 0.0
    %1268 = vmatpush.msra.mxu0 %v1195
    %1269 = vmatpush.msra.mxu0 %v1194
    %1270 = vmatpush.msra.mxu0 %v1193
    %1271 = vmatpush.msra.mxu0 %v1192
    %1272 = vmatmul.f32.gmra.mxu0 %v896
    %v1273 = vpop.f32.mrf.mxu0
    %v1274 = vadd.f32 %v1254, %v1273
    %1275 = vmatmul.f32.gmra.mxu0 %v899
    %v1276 = vpop.f32.mrf.mxu0
    %v1277 = vadd.f32 %v1254, %v1276
    %1278 = vdwg.mxu0
    %v1279 = vadd.f32 %v1054, %v1222
    %v1280 = vadd.f32 %v1055, %v1225
    %v1281 = vxor.u32 %v1279, 2147483648
    %v1282 = vxor.u32 %v1280, 2147483648
    %v1283 = vmul.f32 %v1281, 1.442695
    %v1284 = vpow.pop %v1283
    %v1285 = vmul.f32 %v1282, 1.442695
    %v1286 = vpow.pop %v1285
    %v1287 = vadd.f32 %v1284, 1.0
    %v1288 = vadd.f32 %v1286, 1.0
    %v1289 = vrcp.pop %v1287
    %v1290 = vmul.f32 %v1287, %v1289
    %v1291 = vsub.f32 1.0, %v1290
    %v1292 = vmul.f32 %v1289, %v1291
    %v1293 = vadd.f32 %v1289, %v1292
    %vm1294 = vweird.f32 %v1287
    %vm1295 = vweird.f32 %v1289
    %vm1296 = vmor %vm1294, %vm1295
    %v1297 = vsel %vm1296, %v1289, %v1293
    %v1298 = vand.u32 2147483647, %v1287
    %vm1299 = vcmp.eq.f32.partialorder %v1298, 8.507059e+37
    %v1300 = vand.u32 %v1287, 2147483648
    %v1301 = vor.u32 1.1754944e-38, %v1300
    %v1302 = vsel %vm1299, %v1301, %v1297
    %v1303 = vmul.f32 1.0, %v1302
    %v1304 = vrcp.pop %v1288
    %v1305 = vmul.f32 %v1288, %v1304
    %v1306 = vsub.f32 1.0, %v1305
    %v1307 = vmul.f32 %v1304, %v1306
    %v1308 = vadd.f32 %v1304, %v1307
    %vm1309 = vweird.f32 %v1288
    %vm1310 = vweird.f32 %v1304
    %vm1311 = vmor %vm1309, %vm1310
    %v1312 = vsel %vm1311, %v1304, %v1308
    %v1313 = vand.u32 2147483647, %v1288
    %vm1314 = vcmp.eq.f32.partialorder %v1313, 8.507059e+37
    %v1315 = vand.u32 %v1288, 2147483648
    %v1316 = vor.u32 1.1754944e-38, %v1315
    %v1317 = vsel %vm1314, %v1316, %v1312
    %v1318 = vmul.f32 1.0, %v1317
    %v1319 = vadd.f32 %v1117, %v1248
    %v1320 = vadd.f32 %v1118, %v1251
    %v1321 = vxor.u32 %v1319, 2147483648
    %v1322 = vxor.u32 %v1320, 2147483648
    %v1323 = vmul.f32 %v1321, 1.442695
    %v1324 = vpow.pop %v1323
    %v1325 = vmul.f32 %v1322, 1.442695
    %v1326 = vpow.pop %v1325
    %v1327 = vadd.f32 %v1324, 1.0
    %v1328 = vadd.f32 %v1326, 1.0
    %v1329 = vrcp.pop %v1327
    %v1330 = vmul.f32 %v1327, %v1329
    %v1331 = vsub.f32 1.0, %v1330
    %v1332 = vmul.f32 %v1329, %v1331
    %v1333 = vadd.f32 %v1329, %v1332
    %vm1334 = vweird.f32 %v1327
    %vm1335 = vweird.f32 %v1329
    %vm1336 = vmor %vm1334, %vm1335
    %v1337 = vsel %vm1336, %v1329, %v1333
    %v1338 = vand.u32 2147483647, %v1327
    %vm1339 = vcmp.eq.f32.partialorder %v1338, 8.507059e+37
    %v1340 = vand.u32 %v1327, 2147483648
    %v1341 = vor.u32 1.1754944e-38, %v1340
    %v1342 = vsel %vm1339, %v1341, %v1337
    %v1343 = vmul.f32 1.0, %v1342
    %v1344 = vrcp.pop %v1328
    %v1345 = vmul.f32 %v1328, %v1344
    %v1346 = vsub.f32 1.0, %v1345
    %v1347 = vmul.f32 %v1344, %v1346
    %v1348 = vadd.f32 %v1344, %v1347
    %vm1349 = vweird.f32 %v1328
    %vm1350 = vweird.f32 %v1344
    %vm1351 = vmor %vm1349, %vm1350
    %v1352 = vsel %vm1351, %v1344, %v1348
    %v1353 = vand.u32 2147483647, %v1328
    %vm1354 = vcmp.eq.f32.partialorder %v1353, 8.507059e+37
    %v1355 = vand.u32 %v1328, 2147483648
    %v1356 = vor.u32 1.1754944e-38, %v1355
    %v1357 = vsel %vm1354, %v1356, %v1352
    %v1358 = vmul.f32 1.0, %v1357
    %v1359 = vmul.f32 %v1303, %v1274
    %v1360 = vmul.f32 %v1318, %v1277
    %v1361 = vadd.f32 %v1180, %v1359
    %v1362 = vadd.f32 %v1181, %v1360
    %v1363 = vtanh.pop %v1361
    %v1364 = vtanh.pop %v1362
    %v1365 = vsub.f32 1.0, %v1343
    %v1366 = vsub.f32 1.0, %v1358
    %v1367 = vmul.f32 %v1365, %v1363
    %v1368 = vmul.f32 %v1366, %v1364
    %v1369 = vmul.f32 %v1343, %v889
    %v1370 = vmul.f32 %v1358, %v890
    %v1371 = vadd.f32 %v1367, %v1369
    %v1372 = vadd.f32 %v1368, %v1370
    %v1374 = vsel %vm261, %v1371, 0
    %v1377 = vsel %vm261, %v1372, 0
    %1379 = vmatpush.msra.mxu0 0.0
    %1380 = vmatpush.msra.mxu0 0.0
    %1381 = vmatpush.msra.mxu0 0.0
    %1382 = vmatpush.msra.mxu0 0.0
    %1383 = vmatpush.msra.mxu0 0.0
    %1384 = vmatpush.msra.mxu0 0.0
    %1385 = vmatpush.msra.mxu0 0.0
    %1386 = vmatpush.msra.mxu0 0.0
    %1387 = vmatpush.msra.mxu0 0.0
    %1388 = vmatpush.msra.mxu0 0.0
    %1389 = vmatpush.msra.mxu0 0.0
    %1390 = vmatpush.msra.mxu0 0.0
    %1391 = vmatpush.msra.mxu0 %v1185
    %1392 = vmatpush.msra.mxu0 %v1184
    %1393 = vmatpush.msra.mxu0 %v1183
    %1394 = vmatpush.msra.mxu0 %v1182
    %1395 = vmatmul.f32.gmra.mxu0 %v1374
    %v1396 = vpop.f32.mrf.mxu0
    %v1397 = vadd.f32 %v1202, %v1396
    %1398 = vmatmul.f32.gmra.mxu0 %v1377
    %v1399 = vpop.f32.mrf.mxu0
    %v1400 = vadd.f32 %v1202, %v1399
    %1401 = vdwg.mxu0
    %1402 = vmatpush.msra.mxu0 0.0
    %1403 = vmatpush.msra.mxu0 0.0
    %1404 = vmatpush.msra.mxu0 0.0
    %1405 = vmatpush.msra.mxu0 0.0
    %1406 = vmatpush.msra.mxu0 0.0
    %1407 = vmatpush.msra.mxu0 0.0
    %1408 = vmatpush.msra.mxu0 0.0
    %1409 = vmatpush.msra.mxu0 0.0
    %1410 = vmatpush.msra.mxu0 0.0
    %1411 = vmatpush.msra.mxu0 0.0
    %1412 = vmatpush.msra.mxu0 0.0
    %1413 = vmatpush.msra.mxu0 0.0
    %1414 = vmatpush.msra.mxu0 %v1190
    %1415 = vmatpush.msra.mxu0 %v1189
    %1416 = vmatpush.msra.mxu0 %v1188
    %1417 = vmatpush.msra.mxu0 %v1187
    %1418 = vmatmul.f32.gmra.mxu0 %v1374
    %v1419 = vpop.f32.mrf.mxu0
    %v1420 = vadd.f32 %v1228, %v1419
    %1421 = vmatmul.f32.gmra.mxu0 %v1377
    %v1422 = vpop.f32.mrf.mxu0
    %v1423 = vadd.f32 %v1228, %v1422
    %1424 = vdwg.mxu0
    %1425 = vmatpush.msra.mxu0 0.0
    %1426 = vmatpush.msra.mxu0 0.0
    %1427 = vmatpush.msra.mxu0 0.0
    %1428 = vmatpush.msra.mxu0 0.0
    %1429 = vmatpush.msra.mxu0 0.0
    %1430 = vmatpush.msra.mxu0 0.0
    %1431 = vmatpush.msra.mxu0 0.0
    %1432 = vmatpush.msra.mxu0 0.0
    %1433 = vmatpush.msra.mxu0 0.0
    %1434 = vmatpush.msra.mxu0 0.0
    %1435 = vmatpush.msra.mxu0 0.0
    %1436 = vmatpush.msra.mxu0 0.0
    %1437 = vmatpush.msra.mxu0 %v1195
    %1438 = vmatpush.msra.mxu0 %v1194
    %1439 = vmatpush.msra.mxu0 %v1193
    %1440 = vmatpush.msra.mxu0 %v1192
    %1441 = vmatmul.f32.gmra.mxu0 %v1374
    %v1442 = vpop.f32.mrf.mxu0
    %v1443 = vadd.f32 %v1254, %v1442
    %1444 = vmatmul.f32.gmra.mxu0 %v1377
    %v1445 = vpop.f32.mrf.mxu0
    %v1446 = vadd.f32 %v1254, %v1445
    %1447 = vdwg.mxu0
    %v1448 = vadd.f32 %v1054, %v1397
    %v1449 = vadd.f32 %v1055, %v1400
    %v1450 = vxor.u32 %v1448, 2147483648
    %v1451 = vxor.u32 %v1449, 2147483648
    %v1452 = vmul.f32 %v1450, 1.442695
    %v1453 = vpow.pop %v1452
    %v1454 = vmul.f32 %v1451, 1.442695
    %v1455 = vpow.pop %v1454
    %v1456 = vadd.f32 %v1453, 1.0
    %v1457 = vadd.f32 %v1455, 1.0
    %v1458 = vrcp.pop %v1456
    %v1459 = vmul.f32 %v1456, %v1458
    %v1460 = vsub.f32 1.0, %v1459
    %v1461 = vmul.f32 %v1458, %v1460
    %v1462 = vadd.f32 %v1458, %v1461
    %vm1463 = vweird.f32 %v1456
    %vm1464 = vweird.f32 %v1458
    %vm1465 = vmor %vm1463, %vm1464
    %v1466 = vsel %vm1465, %v1458, %v1462
    %v1467 = vand.u32 2147483647, %v1456
    %vm1468 = vcmp.eq.f32.partialorder %v1467, 8.507059e+37
    %v1469 = vand.u32 %v1456, 2147483648
    %v1470 = vor.u32 1.1754944e-38, %v1469
    %v1471 = vsel %vm1468, %v1470, %v1466
    %v1472 = vmul.f32 1.0, %v1471
    %v1473 = vrcp.pop %v1457
    %v1474 = vmul.f32 %v1457, %v1473
    %v1475 = vsub.f32 1.0, %v1474
    %v1476 = vmul.f32 %v1473, %v1475
    %v1477 = vadd.f32 %v1473, %v1476
    %vm1478 = vweird.f32 %v1457
    %vm1479 = vweird.f32 %v1473
    %vm1480 = vmor %vm1478, %vm1479
    %v1481 = vsel %vm1480, %v1473, %v1477
    %v1482 = vand.u32 2147483647, %v1457
    %vm1483 = vcmp.eq.f32.partialorder %v1482, 8.507059e+37
    %v1484 = vand.u32 %v1457, 2147483648
    %v1485 = vor.u32 1.1754944e-38, %v1484
    %v1486 = vsel %vm1483, %v1485, %v1481
    %v1487 = vmul.f32 1.0, %v1486
    %v1488 = vadd.f32 %v1117, %v1420
    %v1489 = vadd.f32 %v1118, %v1423
    %v1490 = vxor.u32 %v1488, 2147483648
    %v1491 = vxor.u32 %v1489, 2147483648
    %v1492 = vmul.f32 %v1490, 1.442695
    %v1493 = vpow.pop %v1492
    %v1494 = vmul.f32 %v1491, 1.442695
    %v1495 = vpow.pop %v1494
    %v1496 = vadd.f32 %v1493, 1.0
    %v1497 = vadd.f32 %v1495, 1.0
    %v1498 = vrcp.pop %v1496
    %v1499 = vmul.f32 %v1496, %v1498
    %v1500 = vsub.f32 1.0, %v1499
    %v1501 = vmul.f32 %v1498, %v1500
    %v1502 = vadd.f32 %v1498, %v1501
    %vm1503 = vweird.f32 %v1496
    %vm1504 = vweird.f32 %v1498
    %vm1505 = vmor %vm1503, %vm1504
    %v1506 = vsel %vm1505, %v1498, %v1502
    %v1507 = vand.u32 2147483647, %v1496
    %vm1508 = vcmp.eq.f32.partialorder %v1507, 8.507059e+37
    %v1509 = vand.u32 %v1496, 2147483648
    %v1510 = vor.u32 1.1754944e-38, %v1509
    %v1511 = vsel %vm1508, %v1510, %v1506
    %v1512 = vmul.f32 1.0, %v1511
    %v1513 = vrcp.pop %v1497
    %v1514 = vmul.f32 %v1497, %v1513
    %v1515 = vsub.f32 1.0, %v1514
    %v1516 = vmul.f32 %v1513, %v1515
    %v1517 = vadd.f32 %v1513, %v1516
    %vm1518 = vweird.f32 %v1497
    %vm1519 = vweird.f32 %v1513
    %vm1520 = vmor %vm1518, %vm1519
    %v1521 = vsel %vm1520, %v1513, %v1517
    %v1522 = vand.u32 2147483647, %v1497
    %vm1523 = vcmp.eq.f32.partialorder %v1522, 8.507059e+37
    %v1524 = vand.u32 %v1497, 2147483648
    %v1525 = vor.u32 1.1754944e-38, %v1524
    %v1526 = vsel %vm1523, %v1525, %v1521
    %v1527 = vmul.f32 1.0, %v1526
    %v1528 = vmul.f32 %v1472, %v1443
    %v1529 = vmul.f32 %v1487, %v1446
    %v1530 = vadd.f32 %v1180, %v1528
    %v1531 = vadd.f32 %v1181, %v1529
    %v1532 = vtanh.pop %v1530
    %v1533 = vtanh.pop %v1531
    %v1534 = vsub.f32 1.0, %v1512
    %v1535 = vsub.f32 1.0, %v1527
    %v1536 = vmul.f32 %v1534, %v1532
    %v1537 = vmul.f32 %v1535, %v1533
    %v1538 = vmul.f32 %v1512, %v1371
    %v1539 = vmul.f32 %v1527, %v1372
    %v1540 = vadd.f32 %v1536, %v1538
    %v1541 = vadd.f32 %v1537, %v1539
    %v1543 = vsel %vm261, %v1540, 0
    %v1546 = vsel %vm261, %v1541, 0
    %1548 = vmatpush.msra.mxu0 0.0
    %1549 = vmatpush.msra.mxu0 0.0
    %1550 = vmatpush.msra.mxu0 0.0
    %1551 = vmatpush.msra.mxu0 0.0
    %1552 = vmatpush.msra.mxu0 0.0
    %1553 = vmatpush.msra.mxu0 0.0
    %1554 = vmatpush.msra.mxu0 0.0
    %1555 = vmatpush.msra.mxu0 0.0
    %1556 = vmatpush.msra.mxu0 0.0
    %1557 = vmatpush.msra.mxu0 0.0
    %1558 = vmatpush.msra.mxu0 0.0
    %1559 = vmatpush.msra.mxu0 0.0
    %1560 = vmatpush.msra.mxu0 %v1185
    %1561 = vmatpush.msra.mxu0 %v1184
    %1562 = vmatpush.msra.mxu0 %v1183
    %1563 = vmatpush.msra.mxu0 %v1182
    %1564 = vmatmul.f32.gmra.mxu0 %v1543
    %v1565 = vpop.f32.mrf.mxu0
    %v1566 = vadd.f32 %v1202, %v1565
    %1567 = vmatmul.f32.gmra.mxu0 %v1546
    %v1568 = vpop.f32.mrf.mxu0
    %v1569 = vadd.f32 %v1202, %v1568
    %1570 = vdwg.mxu0
    %1571 = vmatpush.msra.mxu0 0.0
    %1572 = vmatpush.msra.mxu0 0.0
    %1573 = vmatpush.msra.mxu0 0.0
    %1574 = vmatpush.msra.mxu0 0.0
    %1575 = vmatpush.msra.mxu0 0.0
    %1576 = vmatpush.msra.mxu0 0.0
    %1577 = vmatpush.msra.mxu0 0.0
    %1578 = vmatpush.msra.mxu0 0.0
    %1579 = vmatpush.msra.mxu0 0.0
    %1580 = vmatpush.msra.mxu0 0.0
    %1581 = vmatpush.msra.mxu0 0.0
    %1582 = vmatpush.msra.mxu0 0.0
    %1583 = vmatpush.msra.mxu0 %v1190
    %1584 = vmatpush.msra.mxu0 %v1189
    %1585 = vmatpush.msra.mxu0 %v1188
    %1586 = vmatpush.msra.mxu0 %v1187
    %1587 = vmatmul.f32.gmra.mxu0 %v1543
    %v1588 = vpop.f32.mrf.mxu0
    %v1589 = vadd.f32 %v1228, %v1588
    %1590 = vmatmul.f32.gmra.mxu0 %v1546
    %v1591 = vpop.f32.mrf.mxu0
    %v1592 = vadd.f32 %v1228, %v1591
    %1593 = vdwg.mxu0
    %1594 = vmatpush.msra.mxu0 0.0
    %1595 = vmatpush.msra.mxu0 0.0
    %1596 = vmatpush.msra.mxu0 0.0
    %1597 = vmatpush.msra.mxu0 0.0
    %1598 = vmatpush.msra.mxu0 0.0
    %1599 = vmatpush.msra.mxu0 0.0
    %1600 = vmatpush.msra.mxu0 0.0
    %1601 = vmatpush.msra.mxu0 0.0
    %1602 = vmatpush.msra.mxu0 0.0
    %1603 = vmatpush.msra.mxu0 0.0
    %1604 = vmatpush.msra.mxu0 0.0
    %1605 = vmatpush.msra.mxu0 0.0
    %1606 = vmatpush.msra.mxu0 %v1195
    %1607 = vmatpush.msra.mxu0 %v1194
    %1608 = vmatpush.msra.mxu0 %v1193
    %1609 = vmatpush.msra.mxu0 %v1192
    %1610 = vmatmul.f32.gmra.mxu0 %v1543
    %v1611 = vpop.f32.mrf.mxu0
    %v1612 = vadd.f32 %v1254, %v1611
    %1613 = vmatmul.f32.gmra.mxu0 %v1546
    %v1614 = vpop.f32.mrf.mxu0
    %v1615 = vadd.f32 %v1254, %v1614
    %1616 = vdwg.mxu0
    %v1617 = vadd.f32 %v1054, %v1566
    %v1618 = vadd.f32 %v1055, %v1569
    %v1619 = vxor.u32 %v1617, 2147483648
    %v1620 = vxor.u32 %v1618, 2147483648
    %v1621 = vmul.f32 %v1619, 1.442695
    %v1622 = vpow.pop %v1621
    %v1623 = vmul.f32 %v1620, 1.442695
    %v1624 = vpow.pop %v1623
    %v1625 = vadd.f32 %v1622, 1.0
    %v1626 = vadd.f32 %v1624, 1.0
    %v1627 = vrcp.pop %v1625
    %v1628 = vmul.f32 %v1625, %v1627
    %v1629 = vsub.f32 1.0, %v1628
    %v1630 = vmul.f32 %v1627, %v1629
    %v1631 = vadd.f32 %v1627, %v1630
    %vm1632 = vweird.f32 %v1625
    %vm1633 = vweird.f32 %v1627
    %vm1634 = vmor %vm1632, %vm1633
    %v1635 = vsel %vm1634, %v1627, %v1631
    %v1636 = vand.u32 2147483647, %v1625
    %vm1637 = vcmp.eq.f32.partialorder %v1636, 8.507059e+37
    %v1638 = vand.u32 %v1625, 2147483648
    %v1639 = vor.u32 1.1754944e-38, %v1638
    %v1640 = vsel %vm1637, %v1639, %v1635
    %v1641 = vmul.f32 1.0, %v1640
    %v1642 = vrcp.pop %v1626
    %v1643 = vmul.f32 %v1626, %v1642
    %v1644 = vsub.f32 1.0, %v1643
    %v1645 = vmul.f32 %v1642, %v1644
    %v1646 = vadd.f32 %v1642, %v1645
    %vm1647 = vweird.f32 %v1626
    %vm1648 = vweird.f32 %v1642
    %vm1649 = vmor %vm1647, %vm1648
    %v1650 = vsel %vm1649, %v1642, %v1646
    %v1651 = vand.u32 2147483647, %v1626
    %vm1652 = vcmp.eq.f32.partialorder %v1651, 8.507059e+37
    %v1653 = vand.u32 %v1626, 2147483648
    %v1654 = vor.u32 1.1754944e-38, %v1653
    %v1655 = vsel %vm1652, %v1654, %v1650
    %v1656 = vmul.f32 1.0, %v1655
    %v1657 = vadd.f32 %v1117, %v1589
    %v1658 = vadd.f32 %v1118, %v1592
    %v1659 = vxor.u32 %v1657, 2147483648
    %v1660 = vxor.u32 %v1658, 2147483648
    %v1661 = vmul.f32 %v1659, 1.442695
    %v1662 = vpow.pop %v1661
    %v1663 = vmul.f32 %v1660, 1.442695
    %v1664 = vpow.pop %v1663
    %v1665 = vadd.f32 %v1662, 1.0
    %v1666 = vadd.f32 %v1664, 1.0
    %v1667 = vrcp.pop %v1665
    %v1668 = vmul.f32 %v1665, %v1667
    %v1669 = vsub.f32 1.0, %v1668
    %v1670 = vmul.f32 %v1667, %v1669
    %v1671 = vadd.f32 %v1667, %v1670
    %vm1672 = vweird.f32 %v1665
    %vm1673 = vweird.f32 %v1667
    %vm1674 = vmor %vm1672, %vm1673
    %v1675 = vsel %vm1674, %v1667, %v1671
    %v1676 = vand.u32 2147483647, %v1665
    %vm1677 = vcmp.eq.f32.partialorder %v1676, 8.507059e+37
    %v1678 = vand.u32 %v1665, 2147483648
    %v1679 = vor.u32 1.1754944e-38, %v1678
    %v1680 = vsel %vm1677, %v1679, %v1675
    %v1681 = vmul.f32 1.0, %v1680
    %v1682 = vrcp.pop %v1666
    %v1683 = vmul.f32 %v1666, %v1682
    %v1684 = vsub.f32 1.0, %v1683
    %v1685 = vmul.f32 %v1682, %v1684
    %v1686 = vadd.f32 %v1682, %v1685
    %vm1687 = vweird.f32 %v1666
    %vm1688 = vweird.f32 %v1682
    %vm1689 = vmor %vm1687, %vm1688
    %v1690 = vsel %vm1689, %v1682, %v1686
    %v1691 = vand.u32 2147483647, %v1666
    %vm1692 = vcmp.eq.f32.partialorder %v1691, 8.507059e+37
    %v1693 = vand.u32 %v1666, 2147483648
    %v1694 = vor.u32 1.1754944e-38, %v1693
    %v1695 = vsel %vm1692, %v1694, %v1690
    %v1696 = vmul.f32 1.0, %v1695
    %v1697 = vmul.f32 %v1641, %v1612
    %v1698 = vmul.f32 %v1656, %v1615
    %v1699 = vadd.f32 %v1180, %v1697
    %v1700 = vadd.f32 %v1181, %v1698
    %v1701 = vtanh.pop %v1699
    %v1702 = vtanh.pop %v1700
    %v1703 = vsub.f32 1.0, %v1681
    %v1704 = vsub.f32 1.0, %v1696
    %v1705 = vmul.f32 %v1703, %v1701
    %v1706 = vmul.f32 %v1704, %v1702
    %v1707 = vmul.f32 %v1681, %v1540
    %v1708 = vmul.f32 %v1696, %v1541
    %v1709 = vadd.f32 %v1705, %v1707
    %v1710 = vadd.f32 %v1706, %v1708
    %1711 = vst.msk [vmem:[#allocation16] sm:$0xff] %vm261, %v1709
    %1712 = vst.msk [vmem:[#allocation16 + $0x8] sm:$0xff] %vm261, %v1710
    // Predicated region
    $region94: #{tpu_custom_call.1} parent=1 // pred_check
      _
    $region95: #{tpu_custom_call.1} parent=1 // pred_check_branch
      %1714 = sbr.rel (0) target = $region97
    $region96: #{tpu_custom_call.1} parent=1 // pred_region
      %1716 = vsyncadd [#allocation4], 0
      %s1717 = sshll.u32 [#allocation16], 4
      %s1718 = int_to_ptr.vmem [resolvable:$true] %s1717
      %s1719 = sshll.u32 %s15, 4
      %s1720 = int_to_ptr.hbm [resolvable:$true] %s1719
      %1725 = dma.vmem_to_hbm [thread:$0]  %s1718, 256, %s1720, [#allocation4], 128, 128, 8
    $region97: #{tpu_custom_call.1} parent=1 // pred_fallthru
      _
    // Predicated region
    $region98: #{tpu_custom_call.1} parent=1 // pred_check
      _
    $region99: #{tpu_custom_call.1} parent=1 // pred_check_branch
      %1727 = sbr.rel (0) target = $region101
    $region100: #{tpu_custom_call.1} parent=1 // pred_region
      %1729 = dma.done [#allocation4], 256
    $region101: #{tpu_custom_call.1} parent=1 // pred_fallthru
      _
    %1730 = vsyncpa [#allocation3], 1
    %1731 = vsyncpa [#allocation6], 1
    %1732 = vsyncpa [#allocation9], 1
    %1733 = vsyncpa [#allocation12], 1
    %1734 = vsyncpa [#allocation15], 1
    %1735 = vsyncpa [#allocation4], 1

</llo_original>
